<compile_context>
chip_gen: v5e
topology: v5e:2x2
jax: 0.10.0
libtpu: 0.0.40
codegen_flags: <defaults>
</compile_context>

<pallas_src>
import functools
import math

import jax
import jax.numpy as jnp
import numpy as np
from jax.experimental import pallas as pl
from jax.experimental.pallas import tpu as pltpu

# ----------------------------- config ---------------------------------------
EMBED_DIM = 32
N_EXPERTS = 4
TOP_K = 2
DROPOUT = 0.0           # nn.Dropout -> inference-mode identity
BATCH = 2
SEQ = 8
LANE = 128              # pad feature dim to full lane width (dense vld/vst)

# Plain Python float, NOT a jnp array: module-level jnp constants get captured
# by the kernel trace and pallas_call rejects captured constants.
NEG_INF = -1e30


# ----------------------------- helpers ---------------------------------------
def _gelu_erf(x):
    """GELU via the Abramowitz-Stegun 7.1.26 erf approximation (|err|<=1.5e-7).

    Matches torch.nn.GELU() (exact-erf variant) to ~1e-7 — an approximation,
    not bit-exact.  Built only from exp/abs/select/polynomial ops that lower in
    Mosaic; the exp rides the EUP slot so it is effectively free next to MXU.
    """
    z = x * 0.7071067811865476                     # x / sqrt(2)
    a = jnp.abs(z)
    t = 1.0 / (1.0 + 0.3275911 * a)
    poly = t * (0.254829592 + t * (-0.284496736 + t * (1.421413741
             + t * (-1.453152027 + t * 1.061405429))))
    erf_a = 1.0 - poly * jnp.exp(-(a * a))
    erf = jnp.where(z < 0.0, -erf_a, erf_a)
    return 0.5 * x * (1.0 + erf)


# ----------------------------- fused kernel ----------------------------------
def fused_moe_kernel(x_ref, noise_ref, wrn_ref, bias_ref,
                     w1_ref, b1_ref, w2_ref, b2_ref, out_ref,
                     *, top_k, n_experts, hidden):
    """grid=(1,). Router + noisy top-k gate + all-expert FFN in one pass."""
    x = x_ref[...]                                                    # (T, DP) f32

    # ---- router: one fused (DP, 2E) matmul at true f32 precision ------------
    rlog = jnp.dot(x, wrn_ref[...],
                   precision=jax.lax.Precision.HIGHEST,
                   preferred_element_type=jnp.float32)                # (T, 2E)
    logits = rlog[:, :n_experts]
    noisy = rlog[:, n_experts:]
    # F.softplus with its default threshold=20 (log1p avoided: use log(1+exp),
    # exact for all but |x|<~1e-7 near-ties which never matter here)
    sp = jnp.where(noisy > 20.0, noisy,
                   jnp.log(1.0 + jnp.exp(jnp.minimum(noisy, 20.0))))
    noise_logits = noise_ref[...] * sp + logits + bias_ref[...]       # (T, E)

    col = jax.lax.broadcasted_iota(jnp.int32, noise_logits.shape, 1)  # (T, E)
    selected = col < 0                 # traced all-False mask (no captured consts)
    # iterative top-k (k tiny & static); first-index tie-break == torch.topk
    for _ in range(top_k):
        cur = jnp.where(selected, NEG_INF, noise_logits)
        vmax = jnp.max(cur, axis=-1, keepdims=True)
        first = jnp.min(jnp.where(cur == vmax, col, n_experts),
                        axis=-1, keepdims=True)
        selected = selected | (col == first)

    masked = jnp.where(selected, noise_logits, NEG_INF)
    m = jnp.max(masked, axis=-1, keepdims=True)
    ex = jnp.exp(masked - m)
    probs = ex / jnp.sum(ex, axis=-1, keepdims=True)   # (T, E); exactly 0 off top-k

    # ---- fused expert FFN: two wide matmuls, bf16 MXU inputs, f32 accum -----
    xb = x.astype(jnp.bfloat16)
    h = jnp.dot(xb, w1_ref[...], preferred_element_type=jnp.float32) + b1_ref[...]
    h = _gelu_erf(h)                                                  # (T, E*H) f32
    # scale each expert's H(=128, lane-group aligned)-wide block by its gate,
    # then one stacked matmul: out = concat_e(p_e * h_e) @ vstack_e(W2_e).
    # NOTE: slices are lane-group aligned so concat lowers without relayout
    # copies (verify with pl.lower_as_mlir if H ever changes off 128).
    hs = jnp.concatenate(
        [h[:, e * hidden:(e + 1) * hidden] * probs[:, e:e + 1]
         for e in range(n_experts)],
        axis=-1).astype(jnp.bfloat16)                                 # (T, E*H)
    y = jnp.dot(hs, w2_ref[...], preferred_element_type=jnp.float32)  # (T, DP)
    # second-layer biases on the VPU: sum_e p_e * b2_e (4 broadcast FMAs,
    # keeps the tiny (T,4)x(4,DP) matmul + its FIFO pop off the store tail)
    b2 = b2_ref[...]
    for e in range(n_experts):
        y = y + probs[:, e:e + 1] * b2[e:e + 1, :]
    out_ref[...] = y
    # Dropout(p) is inference-mode identity.


# ----------------------------- wrapper ----------------------------------------
def prepare_moe_params(params, lane=LANE):
    """One-time weight packing (outside the per-call path): fuse router/noise
    weights column-wise, concat expert weights into the two wide matmul
    operands, zero-pad the feature dim to the lane width (128) for dense
    loads/stores, and cast FFN matmul inputs to bf16 (MXU-native)."""
    E, D, H = params["w1"].shape
    DP = max(lane, D)
    pd = DP - D
    wrn = jnp.concatenate([params["wr"], params["wn"]], axis=1)            # (D, 2E)
    w1c = jnp.transpose(params["w1"], (1, 0, 2)).reshape(D, E * H)         # (D, E*H)
    w2c = params["w2"].reshape(E * H, D)                                   # (E*H, D)
    return dict(
        wrn=jnp.pad(wrn, ((0, pd), (0, 0))).astype(jnp.float32),           # (DP, 2E)
        bias=params["bias"].reshape(1, E).astype(jnp.float32),             # (1, E)
        w1c=jnp.pad(w1c, ((0, pd), (0, 0))).astype(jnp.bfloat16),          # (DP, E*H)
        b1c=params["b1"].reshape(1, E * H).astype(jnp.float32),            # (1, E*H)
        w2c=jnp.pad(w2c, ((0, 0), (0, pd))).astype(jnp.bfloat16),          # (E*H, DP)
        b2=jnp.pad(params["b2"], ((0, 0), (0, pd))).astype(jnp.float32),   # (E, DP)
    )


@jax.jit
def sparse_moe_forward(x, prep, noise):
    B, S, D = x.shape
    T = B * S
    DP, twoE = prep["wrn"].shape
    E = twoE // 2
    EH = prep["w1c"].shape[1]
    H = EH // E

    x_flat = x.reshape(T, D).astype(jnp.float32)
    x_pad = jnp.pad(x_flat, ((0, 0), (0, DP - D)))       # lane-dense input

    # Single grid step: v5e/v6e are single-TC (a 2-step grid was pure per-step
    # pipeline overhead) and at T=16 per-core work is too small for v7x
    # megacore sharding to pay off either.
    out_pad = pl.pallas_call(
        functools.partial(fused_moe_kernel, top_k=TOP_K, n_experts=E, hidden=H),
        out_shape=jax.ShapeDtypeStruct((T, DP), jnp.float32),
        grid=(1,),
        in_specs=[
            pl.BlockSpec((T, DP), lambda t: (0, 0)),      # x (padded)
            pl.BlockSpec((T, E), lambda t: (0, 0)),       # uniform noise (rand_like)
            pl.BlockSpec((DP, 2 * E), lambda t: (0, 0)),  # [router | noise] weights
            pl.BlockSpec((1, E), lambda t: (0, 0)),       # router bias
            pl.BlockSpec((DP, EH), lambda t: (0, 0)),     # W1 concat (bf16)
            pl.BlockSpec((1, EH), lambda t: (0, 0)),      # b1 concat (f32)
            pl.BlockSpec((EH, DP), lambda t: (0, 0)),     # W2 stack (bf16, padded)
            pl.BlockSpec((E, DP), lambda t: (0, 0)),      # b2 stack (f32, padded)
        ],
        out_specs=pl.BlockSpec((T, DP), lambda t: (0, 0)),
        compiler_params=pltpu.CompilerParams(
            dimension_semantics=("arbitrary",)),
    )(x_pad, noise, prep["wrn"], prep["bias"],
      prep["w1c"], prep["b1c"], prep["w2c"], prep["b2"])

    return out_pad[:, :D].reshape(B, S, D)


# ----------------------------- param init (deterministic) --------------------
def init_params(key, embed_dim, n_experts):
    D, E, H = embed_dim, n_experts, 4 * embed_dim
    ks = jax.random.split(key, 6)
    std = 0.02 / math.sqrt(D)
    wr = std * jax.random.normal(ks[0], (D, E), jnp.float32)
    wn = std * jax.random.normal(ks[1], (D, E), jnp.float32)
    bias = jnp.zeros((E,), jnp.float32)
    # nn.Linear default init ~ U(-1/sqrt(fan_in), 1/sqrt(fan_in))
    b1w = 1.0 / math.sqrt(D)
    b2w = 1.0 / math.sqrt(H)
    w1 = jax.random.uniform(ks[2], (E, D, H), jnp.float32, -b1w, b1w)
    b1 = jax.random.uniform(ks[3], (E, H), jnp.float32, -b1w, b1w)
    w2 = jax.random.uniform(ks[4], (E, H, D), jnp.float32, -b2w, b2w)
    b2 = jax.random.uniform(ks[5], (E, D), jnp.float32, -b2w, b2w)
    return dict(wr=wr, wn=wn, bias=bias, w1=w1, b1=b1, w2=w2, b2=b2)


# ----------------------------- pure-JAX reference -----------------------------
def ref_forward(x, params, noise):
    B, S, D = x.shape
    T = B * S
    xf = x.reshape(T, D)
    hi = jax.lax.Precision.HIGHEST
    logits = jnp.dot(xf, params["wr"], precision=hi)
    noisy = jnp.dot(xf, params["wn"], precision=hi)
    sp = jnp.where(noisy > 20.0, noisy,
                   jnp.log1p(jnp.exp(jnp.minimum(noisy, 20.0))))
    nl = noise * sp + logits + params["bias"][None, :]
    topv, topi = jax.lax.top_k(nl, TOP_K)
    sparse = jnp.full_like(nl, -jnp.inf)
    sparse = sparse.at[jnp.arange(T)[:, None], topi].set(topv)
    probs = jax.nn.softmax(sparse, axis=-1)
    out = jnp.zeros_like(xf)
    for e in range(params["w1"].shape[0]):
        h = jax.nn.gelu(jnp.dot(xf, params["w1"][e], precision=hi)
                        + params["b1"][e], approximate=False)
        y = jnp.dot(h, params["w2"][e], precision=hi) + params["b2"][e]
        out = out + probs[:, e:e + 1] * y
    return out.reshape(B, S, D)


# ----------------------------- main -------------------------------------------
if __name__ == "__main__":
    root = jax.random.PRNGKey(0)
    k_param, k_x, k_noise = jax.random.split(root, 3)

    params = init_params(k_param, EMBED_DIM, N_EXPERTS)
    x = jax.random.normal(k_x, (BATCH, SEQ, EMBED_DIM), jnp.float32)
    # torch.rand_like equivalent (uniform [0,1)); generated once in glue and
    # shared by kernel + reference so the top-k decisions are identical.
    noise = jax.random.uniform(k_noise, (BATCH * SEQ, N_EXPERTS), dtype=jnp.float32)

    prep = prepare_moe_params(params)               # one-time weight packing
    out = jax.block_until_ready(sparse_moe_forward(x, prep, noise))

    ref = jax.block_until_ready(ref_forward(x, params, noise))
    # Tolerance 2e-2: the kernel feeds bf16 inputs to the expert-FFN MXU
    # matmuls (f32 reference); router/gating stay f32 at HIGHEST precision.
    np.testing.assert_allclose(np.asarray(out), np.asarray(ref), rtol=2e-2, atol=2e-2)

    print("KERNEL_OK")
</pallas_src>

<mosaic_0001>
module attributes {stable_mosaic.version = 11 : i64} {
  func.func @fused_moe_kernel(%arg0: i32, %arg1: memref<16x128xf32, #tpu.memory_space<vmem>>, %arg2: memref<16x4xf32, #tpu.memory_space<vmem>>, %arg3: memref<128x8xf32, #tpu.memory_space<vmem>>, %arg4: memref<1x4xf32, #tpu.memory_space<vmem>>, %arg5: memref<128x512xbf16, #tpu.memory_space<vmem>>, %arg6: memref<1x512xf32, #tpu.memory_space<vmem>>, %arg7: memref<512x128xbf16, #tpu.memory_space<vmem>>, %arg8: memref<4x128xf32, #tpu.memory_space<vmem>>, %arg9: memref<16x128xf32, #tpu.memory_space<vmem>>) attributes {dimension_semantics = [#tpu.dimension_semantics<arbitrary>], iteration_bounds = array<i64: 1>, scalar_prefetch = 0 : i64, scratch_operands = 0 : i64, tpu.core_type = #tpu.core_type<tc>, window_params = [{pipeline_mode = #tpu.pipeline_mode<synchronous>, transform_indices = @transform_0, window_bounds = array<i64: 16, 128>}, {pipeline_mode = #tpu.pipeline_mode<synchronous>, transform_indices = @transform_1, window_bounds = array<i64: 16, 4>}, {pipeline_mode = #tpu.pipeline_mode<synchronous>, transform_indices = @transform_2, window_bounds = array<i64: 128, 8>}, {pipeline_mode = #tpu.pipeline_mode<synchronous>, transform_indices = @transform_3, window_bounds = array<i64: 1, 4>}, {pipeline_mode = #tpu.pipeline_mode<synchronous>, transform_indices = @transform_4, window_bounds = array<i64: 128, 512>}, {pipeline_mode = #tpu.pipeline_mode<synchronous>, transform_indices = @transform_5, window_bounds = array<i64: 1, 512>}, {pipeline_mode = #tpu.pipeline_mode<synchronous>, transform_indices = @transform_6, window_bounds = array<i64: 512, 128>}, {pipeline_mode = #tpu.pipeline_mode<synchronous>, transform_indices = @transform_7, window_bounds = array<i64: 4, 128>}, {pipeline_mode = #tpu.pipeline_mode<synchronous>, transform_indices = @transform_8, window_bounds = array<i64: 16, 128>}]} {
    %c0 = arith.constant 0 : index
    %c0_0 = arith.constant 0 : index
    %0 = vector.load %arg1[%c0, %c0_0] : memref<16x128xf32, #tpu.memory_space<vmem>>, vector<16x128xf32>
    %c0_1 = arith.constant 0 : index
    %c0_2 = arith.constant 0 : index
    %1 = vector.load %arg3[%c0_1, %c0_2] : memref<128x8xf32, #tpu.memory_space<vmem>>, vector<128x8xf32>
    %cst = arith.constant dense<0.000000e+00> : vector<16x8xf32>
    %2 = tpu.matmul %0, %1, %cst {dimension_numbers = #tpu.dot_dimension_numbers<[1], [0], [0], [1], [0, 0, 1, 1], [], []>, precision = #tpu.contract_precision<fp32>} : vector<16x128xf32>, vector<128x8xf32>, vector<16x8xf32> -> vector<16x8xf32>
    %3 = vector.extract_strided_slice %2 {offsets = [0, 0], sizes = [16, 4], strides = [1, 1]} : vector<16x8xf32> to vector<16x4xf32>
    %4 = vector.extract_strided_slice %2 {offsets = [0, 4], sizes = [16, 4], strides = [1, 1]} : vector<16x8xf32> to vector<16x4xf32>
    %cst_3 = arith.constant 2.000000e+01 : f32
    %5 = vector.broadcast %cst_3 : f32 to vector<16x4xf32>
    %6 = arith.cmpf ogt, %4, %5 : vector<16x4xf32>
    %cst_4 = arith.constant 2.000000e+01 : f32
    %7 = vector.broadcast %cst_4 : f32 to vector<16x4xf32>
    %8 = arith.minimumf %4, %7 : vector<16x4xf32>
    %9 = math.exp %8 : vector<16x4xf32>
    %cst_5 = arith.constant 1.000000e+00 : f32
    %10 = vector.broadcast %cst_5 : f32 to vector<16x4xf32>
    %11 = arith.addf %10, %9 : vector<16x4xf32>
    %12 = math.log %11 : vector<16x4xf32>
    %13 = arith.select %6, %4, %12 : vector<16x4xi1>, vector<16x4xf32>
    %c0_6 = arith.constant 0 : index
    %c0_7 = arith.constant 0 : index
    %14 = vector.load %arg2[%c0_6, %c0_7] : memref<16x4xf32, #tpu.memory_space<vmem>>, vector<16x4xf32>
    %15 = arith.mulf %14, %13 : vector<16x4xf32>
    %16 = arith.addf %15, %3 : vector<16x4xf32>
    %c0_8 = arith.constant 0 : index
    %c0_9 = arith.constant 0 : index
    %17 = vector.load %arg4[%c0_8, %c0_9] : memref<1x4xf32, #tpu.memory_space<vmem>>, vector<1x4xf32>
    %18 = vector.broadcast %17 : vector<1x4xf32> to vector<16x4xf32>
    %19 = arith.addf %16, %18 : vector<16x4xf32>
    %20 = tpu.iota {dimensions = array<i32: 1>} : vector<16x4xi32>
    %c0_i32 = arith.constant 0 : i32
    %21 = vector.broadcast %c0_i32 : i32 to vector<16x4xi32>
    %22 = arith.cmpi slt, %20, %21 : vector<16x4xi32>
    %cst_10 = arith.constant -1.000000e+30 : f32
    %23 = vector.broadcast %cst_10 : f32 to vector<16x4xf32>
    %24 = arith.select %22, %23, %19 : vector<16x4xi1>, vector<16x4xf32>
    %cst_11 = arith.constant dense<0xFF800000> : vector<16xf32>
    %25 = vector.multi_reduction <maximumf>, %24, %cst_11 [1] : vector<16x4xf32> to vector<16xf32>
    %26 = vector.shape_cast %25 : vector<16xf32> to vector<16x1xf32>
    %27 = vector.broadcast %26 : vector<16x1xf32> to vector<16x4xf32>
    %28 = arith.cmpf oeq, %24, %27 : vector<16x4xf32>
    %c4_i32 = arith.constant 4 : i32
    %29 = vector.broadcast %c4_i32 : i32 to vector<16x4xi32>
    %30 = arith.select %28, %20, %29 : vector<16x4xi1>, vector<16x4xi32>
    %cst_12 = arith.constant dense<2147483647> : vector<16xi32>
    %31 = vector.multi_reduction <minsi>, %30, %cst_12 [1] : vector<16x4xi32> to vector<16xi32>
    %32 = vector.shape_cast %31 : vector<16xi32> to vector<16x1xi32>
    %33 = vector.broadcast %32 : vector<16x1xi32> to vector<16x4xi32>
    %34 = arith.cmpi eq, %20, %33 : vector<16x4xi32>
    %35 = arith.ori %22, %34 : vector<16x4xi1>
    %cst_13 = arith.constant -1.000000e+30 : f32
    %36 = vector.broadcast %cst_13 : f32 to vector<16x4xf32>
    %37 = arith.select %35, %36, %19 : vector<16x4xi1>, vector<16x4xf32>
    %cst_14 = arith.constant dense<0xFF800000> : vector<16xf32>
    %38 = vector.multi_reduction <maximumf>, %37, %cst_14 [1] : vector<16x4xf32> to vector<16xf32>
    %39 = vector.shape_cast %38 : vector<16xf32> to vector<16x1xf32>
    %40 = vector.broadcast %39 : vector<16x1xf32> to vector<16x4xf32>
    %41 = arith.cmpf oeq, %37, %40 : vector<16x4xf32>
    %c4_i32_15 = arith.constant 4 : i32
    %42 = vector.broadcast %c4_i32_15 : i32 to vector<16x4xi32>
    %43 = arith.select %41, %20, %42 : vector<16x4xi1>, vector<16x4xi32>
    %cst_16 = arith.constant dense<2147483647> : vector<16xi32>
    %44 = vector.multi_reduction <minsi>, %43, %cst_16 [1] : vector<16x4xi32> to vector<16xi32>
    %45 = vector.shape_cast %44 : vector<16xi32> to vector<16x1xi32>
    %46 = vector.broadcast %45 : vector<16x1xi32> to vector<16x4xi32>
    %47 = arith.cmpi eq, %20, %46 : vector<16x4xi32>
    %48 = arith.ori %35, %47 : vector<16x4xi1>
    %cst_17 = arith.constant -1.000000e+30 : f32
    %49 = vector.broadcast %cst_17 : f32 to vector<16x4xf32>
    %50 = arith.select %48, %19, %49 : vector<16x4xi1>, vector<16x4xf32>
    %cst_18 = arith.constant dense<0xFF800000> : vector<16xf32>
    %51 = vector.multi_reduction <maximumf>, %50, %cst_18 [1] : vector<16x4xf32> to vector<16xf32>
    %52 = vector.shape_cast %51 : vector<16xf32> to vector<16x1xf32>
    %53 = vector.broadcast %52 : vector<16x1xf32> to vector<16x4xf32>
    %54 = arith.subf %50, %53 : vector<16x4xf32>
    %55 = math.exp %54 : vector<16x4xf32>
    %cst_19 = arith.constant dense<0.000000e+00> : vector<16xf32>
    %56 = vector.multi_reduction <add>, %55, %cst_19 [1] : vector<16x4xf32> to vector<16xf32>
    %57 = vector.shape_cast %56 : vector<16xf32> to vector<16x1xf32>
    %58 = vector.broadcast %57 : vector<16x1xf32> to vector<16x4xf32>
    %59 = arith.divf %55, %58 : vector<16x4xf32>
    %60 = arith.truncf %0 : vector<16x128xf32> to vector<16x128xbf16>
    %c0_20 = arith.constant 0 : index
    %c0_21 = arith.constant 0 : index
    %61 = vector.load %arg5[%c0_20, %c0_21] : memref<128x512xbf16, #tpu.memory_space<vmem>>, vector<128x512xbf16>
    %cst_22 = arith.constant dense<0.000000e+00> : vector<16x512xf32>
    %62 = tpu.matmul %60, %61, %cst_22 {dimension_numbers = #tpu.dot_dimension_numbers<[1], [0], [0], [1], [0, 0, 1, 1], [], []>} : vector<16x128xbf16>, vector<128x512xbf16>, vector<16x512xf32> -> vector<16x512xf32>
    %c0_23 = arith.constant 0 : index
    %c0_24 = arith.constant 0 : index
    %63 = vector.load %arg6[%c0_23, %c0_24] : memref<1x512xf32, #tpu.memory_space<vmem>>, vector<1x512xf32>
    %64 = vector.broadcast %63 : vector<1x512xf32> to vector<16x512xf32>
    %65 = arith.addf %62, %64 : vector<16x512xf32>
    %cst_25 = arith.constant 0.707106769 : f32
    %66 = vector.broadcast %cst_25 : f32 to vector<16x512xf32>
    %67 = arith.mulf %65, %66 : vector<16x512xf32>
    %68 = math.absf %67 : vector<16x512xf32>
    %cst_26 = arith.constant 0.327591091 : f32
    %69 = vector.broadcast %cst_26 : f32 to vector<16x512xf32>
    %70 = arith.mulf %69, %68 : vector<16x512xf32>
    %cst_27 = arith.constant 1.000000e+00 : f32
    %71 = vector.broadcast %cst_27 : f32 to vector<16x512xf32>
    %72 = arith.addf %71, %70 : vector<16x512xf32>
    %cst_28 = arith.constant 1.000000e+00 : f32
    %73 = vector.broadcast %cst_28 : f32 to vector<16x512xf32>
    %74 = arith.divf %73, %72 : vector<16x512xf32>
    %cst_29 = arith.constant 1.06140542 : f32
    %75 = vector.broadcast %cst_29 : f32 to vector<16x512xf32>
    %76 = arith.mulf %74, %75 : vector<16x512xf32>
    %cst_30 = arith.constant -1.45315206 : f32
    %77 = vector.broadcast %cst_30 : f32 to vector<16x512xf32>
    %78 = arith.addf %77, %76 : vector<16x512xf32>
    %79 = arith.mulf %74, %78 : vector<16x512xf32>
    %cst_31 = arith.constant 1.42141378 : f32
    %80 = vector.broadcast %cst_31 : f32 to vector<16x512xf32>
    %81 = arith.addf %80, %79 : vector<16x512xf32>
    %82 = arith.mulf %74, %81 : vector<16x512xf32>
    %cst_32 = arith.constant -0.284496725 : f32
    %83 = vector.broadcast %cst_32 : f32 to vector<16x512xf32>
    %84 = arith.addf %83, %82 : vector<16x512xf32>
    %85 = arith.mulf %74, %84 : vector<16x512xf32>
    %cst_33 = arith.constant 0.254829586 : f32
    %86 = vector.broadcast %cst_33 : f32 to vector<16x512xf32>
    %87 = arith.addf %86, %85 : vector<16x512xf32>
    %88 = arith.mulf %74, %87 : vector<16x512xf32>
    %89 = arith.mulf %68, %68 : vector<16x512xf32>
    %cst_34 = arith.constant 0.000000e+00 : f32
    %90 = vector.broadcast %cst_34 : f32 to vector<16x512xf32>
    %91 = arith.subf %90, %89 : vector<16x512xf32>
    %92 = math.exp %91 : vector<16x512xf32>
    %93 = arith.mulf %88, %92 : vector<16x512xf32>
    %cst_35 = arith.constant 1.000000e+00 : f32
    %94 = vector.broadcast %cst_35 : f32 to vector<16x512xf32>
    %95 = arith.subf %94, %93 : vector<16x512xf32>
    %cst_36 = arith.constant 0.000000e+00 : f32
    %96 = vector.broadcast %cst_36 : f32 to vector<16x512xf32>
    %97 = arith.cmpf olt, %67, %96 : vector<16x512xf32>
    %cst_37 = arith.constant 0.000000e+00 : f32
    %98 = vector.broadcast %cst_37 : f32 to vector<16x512xf32>
    %99 = arith.subf %98, %95 : vector<16x512xf32>
    %100 = arith.select %97, %99, %95 : vector<16x512xi1>, vector<16x512xf32>
    %cst_38 = arith.constant 5.000000e-01 : f32
    %101 = vector.broadcast %cst_38 : f32 to vector<16x512xf32>
    %102 = arith.mulf %101, %65 : vector<16x512xf32>
    %cst_39 = arith.constant 1.000000e+00 : f32
    %103 = vector.broadcast %cst_39 : f32 to vector<16x512xf32>
    %104 = arith.addf %103, %100 : vector<16x512xf32>
    %105 = arith.mulf %102, %104 : vector<16x512xf32>
    %106 = vector.extract_strided_slice %105 {offsets = [0, 0], sizes = [16, 128], strides = [1, 1]} : vector<16x512xf32> to vector<16x128xf32>
    %107 = vector.extract_strided_slice %59 {offsets = [0, 0], sizes = [16, 1], strides = [1, 1]} : vector<16x4xf32> to vector<16x1xf32>
    %108 = vector.broadcast %107 : vector<16x1xf32> to vector<16x128xf32>
    %109 = arith.mulf %106, %108 : vector<16x128xf32>
    %110 = vector.extract_strided_slice %105 {offsets = [0, 128], sizes = [16, 128], strides = [1, 1]} : vector<16x512xf32> to vector<16x128xf32>
    %111 = vector.extract_strided_slice %59 {offsets = [0, 1], sizes = [16, 1], strides = [1, 1]} : vector<16x4xf32> to vector<16x1xf32>
    %112 = vector.broadcast %111 : vector<16x1xf32> to vector<16x128xf32>
    %113 = arith.mulf %110, %112 : vector<16x128xf32>
    %114 = vector.extract_strided_slice %105 {offsets = [0, 256], sizes = [16, 128], strides = [1, 1]} : vector<16x512xf32> to vector<16x128xf32>
    %115 = vector.extract_strided_slice %59 {offsets = [0, 2], sizes = [16, 1], strides = [1, 1]} : vector<16x4xf32> to vector<16x1xf32>
    %116 = vector.broadcast %115 : vector<16x1xf32> to vector<16x128xf32>
    %117 = arith.mulf %114, %116 : vector<16x128xf32>
    %118 = vector.extract_strided_slice %105 {offsets = [0, 384], sizes = [16, 128], strides = [1, 1]} : vector<16x512xf32> to vector<16x128xf32>
    %119 = vector.extract_strided_slice %59 {offsets = [0, 3], sizes = [16, 1], strides = [1, 1]} : vector<16x4xf32> to vector<16x1xf32>
    %120 = vector.broadcast %119 : vector<16x1xf32> to vector<16x128xf32>
    %121 = arith.mulf %118, %120 : vector<16x128xf32>
    %122 = tpu.concatenate %109, %113, %117, %121 in 1 : vector<16x128xf32>, vector<16x128xf32>, vector<16x128xf32>, vector<16x128xf32> -> vector<16x512xf32>
    %123 = arith.truncf %122 : vector<16x512xf32> to vector<16x512xbf16>
    %c0_40 = arith.constant 0 : index
    %c0_41 = arith.constant 0 : index
    %124 = vector.load %arg7[%c0_40, %c0_41] : memref<512x128xbf16, #tpu.memory_space<vmem>>, vector<512x128xbf16>
    %cst_42 = arith.constant dense<0.000000e+00> : vector<16x128xf32>
    %125 = tpu.matmul %123, %124, %cst_42 {dimension_numbers = #tpu.dot_dimension_numbers<[1], [0], [0], [1], [0, 0, 1, 1], [], []>} : vector<16x512xbf16>, vector<512x128xbf16>, vector<16x128xf32> -> vector<16x128xf32>
    %c0_43 = arith.constant 0 : index
    %c0_44 = arith.constant 0 : index
    %126 = vector.load %arg8[%c0_43, %c0_44] : memref<4x128xf32, #tpu.memory_space<vmem>>, vector<4x128xf32>
    %127 = vector.extract_strided_slice %59 {offsets = [0, 0], sizes = [16, 1], strides = [1, 1]} : vector<16x4xf32> to vector<16x1xf32>
    %128 = vector.extract_strided_slice %126 {offsets = [0, 0], sizes = [1, 128], strides = [1, 1]} : vector<4x128xf32> to vector<1x128xf32>
    %129 = vector.broadcast %127 : vector<16x1xf32> to vector<16x128xf32>
    %130 = vector.broadcast %128 : vector<1x128xf32> to vector<16x128xf32>
    %131 = arith.mulf %129, %130 : vector<16x128xf32>
    %132 = arith.addf %125, %131 : vector<16x128xf32>
    %133 = vector.extract_strided_slice %59 {offsets = [0, 1], sizes = [16, 1], strides = [1, 1]} : vector<16x4xf32> to vector<16x1xf32>
    %134 = vector.extract_strided_slice %126 {offsets = [1, 0], sizes = [1, 128], strides = [1, 1]} : vector<4x128xf32> to vector<1x128xf32>
    %135 = vector.broadcast %133 : vector<16x1xf32> to vector<16x128xf32>
    %136 = vector.broadcast %134 : vector<1x128xf32> to vector<16x128xf32>
    %137 = arith.mulf %135, %136 : vector<16x128xf32>
    %138 = arith.addf %132, %137 : vector<16x128xf32>
    %139 = vector.extract_strided_slice %59 {offsets = [0, 2], sizes = [16, 1], strides = [1, 1]} : vector<16x4xf32> to vector<16x1xf32>
    %140 = vector.extract_strided_slice %126 {offsets = [2, 0], sizes = [1, 128], strides = [1, 1]} : vector<4x128xf32> to vector<1x128xf32>
    %141 = vector.broadcast %139 : vector<16x1xf32> to vector<16x128xf32>
    %142 = vector.broadcast %140 : vector<1x128xf32> to vector<16x128xf32>
    %143 = arith.mulf %141, %142 : vector<16x128xf32>
    %144 = arith.addf %138, %143 : vector<16x128xf32>
    %145 = vector.extract_strided_slice %59 {offsets = [0, 3], sizes = [16, 1], strides = [1, 1]} : vector<16x4xf32> to vector<16x1xf32>
    %146 = vector.extract_strided_slice %126 {offsets = [3, 0], sizes = [1, 128], strides = [1, 1]} : vector<4x128xf32> to vector<1x128xf32>
    %147 = vector.broadcast %145 : vector<16x1xf32> to vector<16x128xf32>
    %148 = vector.broadcast %146 : vector<1x128xf32> to vector<16x128xf32>
    %149 = arith.mulf %147, %148 : vector<16x128xf32>
    %150 = arith.addf %144, %149 : vector<16x128xf32>
    %c0_45 = arith.constant 0 : index
    %c0_46 = arith.constant 0 : index
    %151 = vector.load %arg9[%c0_45, %c0_46] : memref<16x128xf32, #tpu.memory_space<vmem>>, vector<16x128xf32>
    tpu.vector_store %arg9[%c0_45, %c0_46], %150 {strides = array<i32>} : memref<16x128xf32, #tpu.memory_space<vmem>>, vector<16x128xf32>,
    return
  }
  func.func @transform_0(%arg0: i32) -> (i32, i32) {
    %c0_i32 = arith.constant 0 : i32
    %c0_i32_0 = arith.constant 0 : i32
    %c0_i32_1 = arith.constant 0 : i32
    return %c0_i32, %c0_i32_0 : i32, i32
  }
  func.func @transform_1(%arg0: i32) -> (i32, i32) {
    %c0_i32 = arith.constant 0 : i32
    %c0_i32_0 = arith.constant 0 : i32
    %c0_i32_1 = arith.constant 0 : i32
    return %c0_i32, %c0_i32_0 : i32, i32
  }
  func.func @transform_2(%arg0: i32) -> (i32, i32) {
    %c0_i32 = arith.constant 0 : i32
    %c0_i32_0 = arith.constant 0 : i32
    %c0_i32_1 = arith.constant 0 : i32
    return %c0_i32, %c0_i32_0 : i32, i32
  }
  func.func @transform_3(%arg0: i32) -> (i32, i32) {
    %c0_i32 = arith.constant 0 : i32
    %c0_i32_0 = arith.constant 0 : i32
    %c0_i32_1 = arith.constant 0 : i32
    return %c0_i32, %c0_i32_0 : i32, i32
  }
  func.func @transform_4(%arg0: i32) -> (i32, i32) {
    %c0_i32 = arith.constant 0 : i32
    %c0_i32_0 = arith.constant 0 : i32
    %c0_i32_1 = arith.constant 0 : i32
    return %c0_i32, %c0_i32_0 : i32, i32
  }
  func.func @transform_5(%arg0: i32) -> (i32, i32) {
    %c0_i32 = arith.constant 0 : i32
    %c0_i32_0 = arith.constant 0 : i32
    %c0_i32_1 = arith.constant 0 : i32
    return %c0_i32, %c0_i32_0 : i32, i32
  }
  func.func @transform_6(%arg0: i32) -> (i32, i32) {
    %c0_i32 = arith.constant 0 : i32
    %c0_i32_0 = arith.constant 0 : i32
    %c0_i32_1 = arith.constant 0 : i32
    return %c0_i32, %c0_i32_0 : i32, i32
  }
  func.func @transform_7(%arg0: i32) -> (i32, i32) {
    %c0_i32 = arith.constant 0 : i32
    %c0_i32_0 = arith.constant 0 : i32
    %c0_i32_1 = arith.constant 0 : i32
    return %c0_i32, %c0_i32_0 : i32, i32
  }
  func.func @transform_8(%arg0: i32) -> (i32, i32) {
    %c0_i32 = arith.constant 0 : i32
    %c0_i32_0 = arith.constant 0 : i32
    %c0_i32_1 = arith.constant 0 : i32
    return %c0_i32, %c0_i32_0 : i32, i32
  }
}

</mosaic_0001>

<llo_original>
// kernel: sparse_moe_forward.1
$region0: #{sparse_moe_forward.1}
  #allocation0 [shape = 'u32[]', space=smem, size = 0x4, offset = 0x4, fixed_abs, tag = 'smem constant byte address 0x4 - core index']
  #allocation1 [shape = 'u32[72,128]{1,0:T(1,128)}', space=vmem, size = 0x9000, scoped, tag = 'internal scratch']
  %s0 = inlined_call_operand.vmem [shape: f32[16,128], index: 0, kind: input, shape index: {}]
  %s1 = inlined_call_operand.vmem [shape: f32[16,4], index: 1, kind: input, shape index: {}]
  %s2 = inlined_call_operand.vmem [shape: f32[128,8], index: 2, kind: input, shape index: {}]
  %s3 = inlined_call_operand.vmem [shape: f32[1,4], index: 3, kind: input, shape index: {}]
  %s4 = inlined_call_operand.hbm [shape: bf16[128,512], index: 4, kind: input, shape index: {}]
  %s5 = inlined_call_operand.vmem [shape: f32[1,512], index: 5, kind: input, shape index: {}]
  %s6 = inlined_call_operand.hbm [shape: bf16[512,128], index: 6, kind: input, shape index: {}]
  %s7 = inlined_call_operand.vmem [shape: f32[4,128], index: 7, kind: input, shape index: {}]
  %s8 = inlined_call_operand.vmem [shape: f32[16,128], index: 8, kind: output, shape index: {}]
  %s9 = sld [smem:[#allocation0]]
  $region50: #{sparse_moe_forward.1} parent=0
    _
  %s11 = ssub.s32 1, %s9
  %s12 = scalar_select 0, %s11, %s9
  $region1: #{sparse_moe_forward.1} parent=0
    #allocation2 [shape = 'u8[131072]{0}', space=vmem, size = 0x20000, scoped, tag = 'input window, operand 4, single buffered']
    #allocation3 [shape = 's32[1]{0}', space=sflag, size = 0x4, scoped, tag = 'scoped memory for sparse_moe_forward.1']
    #allocation4 [shape = 'u8[131072]{0}', space=vmem, size = 0x20000, scoped, tag = 'input window, operand 6, single buffered']
    #allocation5 [shape = 's32[1]{0}', space=sflag, size = 0x4, scoped, tag = 'scoped memory for sparse_moe_forward.1']
    %13 = vsyncpa [#allocation3], 0
    %14 = vsyncpa [#allocation5], 0
    // Predicated region
    $region2: #{sparse_moe_forward.1} parent=1 // pred_check
      _
    $region3: #{sparse_moe_forward.1} parent=1 // pred_check_branch
      %16 = sbr.rel (0) target = $region5
    $region4: #{sparse_moe_forward.1} parent=1 // pred_region
      _
    $region5: #{sparse_moe_forward.1} parent=1 // pred_fallthru
      _
    // Predicated region
    $region6: #{sparse_moe_forward.1} parent=1 // pred_check
      _
    $region7: #{sparse_moe_forward.1} parent=1 // pred_check_branch
      %18 = sbr.rel (0) target = $region9
    $region8: #{sparse_moe_forward.1} parent=1 // pred_region
      _
    $region9: #{sparse_moe_forward.1} parent=1 // pred_fallthru
      _
    // Predicated region
    $region10: #{sparse_moe_forward.1} parent=1 // pred_check
      _
    $region11: #{sparse_moe_forward.1} parent=1 // pred_check_branch
      %20 = sbr.rel (0) target = $region13
    $region12: #{sparse_moe_forward.1} parent=1 // pred_region
      _
    $region13: #{sparse_moe_forward.1} parent=1 // pred_fallthru
      _
    // Predicated region
    $region14: #{sparse_moe_forward.1} parent=1 // pred_check
      _
    $region15: #{sparse_moe_forward.1} parent=1 // pred_check_branch
      %22 = sbr.rel (0) target = $region17
    $region16: #{sparse_moe_forward.1} parent=1 // pred_region
      _
    $region17: #{sparse_moe_forward.1} parent=1 // pred_fallthru
      _
    // Predicated region
    $region18: #{sparse_moe_forward.1} parent=1 // pred_check
      _
    $region19: #{sparse_moe_forward.1} parent=1 // pred_check_branch
      %24 = sbr.rel (0) target = $region21
    $region20: #{sparse_moe_forward.1} parent=1 // pred_region
      %26 = vsyncadd [#allocation3], 0
      %s27 = sshll.u32 %s4, 4
      %s28 = int_to_ptr.hbm [resolvable:$true] %s27
      %s29 = sshll.u32 [#allocation2], 4
      %s30 = int_to_ptr.vmem [resolvable:$true] %s29
      %35 = dma.hbm_to_vmem [thread:$0]  %s28, 4096, %s30, [#allocation3], 256, 256, 16
    $region21: #{sparse_moe_forward.1} parent=1 // pred_fallthru
      _
    // Predicated region
    $region22: #{sparse_moe_forward.1} parent=1 // pred_check
      _
    $region23: #{sparse_moe_forward.1} parent=1 // pred_check_branch
      %37 = sbr.rel (0) target = $region25
    $region24: #{sparse_moe_forward.1} parent=1 // pred_region
      _
    $region25: #{sparse_moe_forward.1} parent=1 // pred_fallthru
      _
    // Predicated region
    $region26: #{sparse_moe_forward.1} parent=1 // pred_check
      _
    $region27: #{sparse_moe_forward.1} parent=1 // pred_check_branch
      %39 = sbr.rel (0) target = $region29
    $region28: #{sparse_moe_forward.1} parent=1 // pred_region
      %41 = vsyncadd [#allocation5], 0
      %s42 = sshll.u32 %s6, 4
      %s43 = int_to_ptr.hbm [resolvable:$true] %s42
      %s44 = sshll.u32 [#allocation4], 4
      %s45 = int_to_ptr.vmem [resolvable:$true] %s44
      %50 = dma.hbm_to_vmem [thread:$0]  %s43, 4096, %s45, [#allocation5], 64, 64, 4
    $region29: #{sparse_moe_forward.1} parent=1 // pred_fallthru
      _
    // Predicated region
    $region30: #{sparse_moe_forward.1} parent=1 // pred_check
      _
    $region31: #{sparse_moe_forward.1} parent=1 // pred_check_branch
      %52 = sbr.rel (0) target = $region33
    $region32: #{sparse_moe_forward.1} parent=1 // pred_region
      _
    $region33: #{sparse_moe_forward.1} parent=1 // pred_fallthru
      _
    // Predicated region
    $region34: #{sparse_moe_forward.1} parent=1 // pred_check
      _
    $region35: #{sparse_moe_forward.1} parent=1 // pred_check_branch
      %54 = sbr.rel (0) target = $region37
    $region36: #{sparse_moe_forward.1} parent=1 // pred_region
      %56 = dma.done [#allocation3], 4096
    $region37: #{sparse_moe_forward.1} parent=1 // pred_fallthru
      _
    // Predicated region
    $region38: #{sparse_moe_forward.1} parent=1 // pred_check
      _
    $region39: #{sparse_moe_forward.1} parent=1 // pred_check_branch
      %58 = sbr.rel (0) target = $region41
    $region40: #{sparse_moe_forward.1} parent=1 // pred_region
      %60 = dma.done [#allocation5], 4096
    $region41: #{sparse_moe_forward.1} parent=1 // pred_fallthru
      _
    %v61 = vld [vmem:[%s0] sm:$0xff]
    %v62 = vld [vmem:[%s0 + $0x8] sm:$0xff]
    %v63 = vld [vmem:[%s2] sm:$0xff]
    %v64 = vld [vmem:[%s2 + $0x8] sm:$0xff]
    %v65 = vld [vmem:[%s2 + $0x10] sm:$0xff]
    %v66 = vld [vmem:[%s2 + $0x18] sm:$0xff]
    %v67 = vld [vmem:[%s2 + $0x20] sm:$0xff]
    %v68 = vld [vmem:[%s2 + $0x28] sm:$0xff]
    %v69 = vld [vmem:[%s2 + $0x30] sm:$0xff]
    %v70 = vld [vmem:[%s2 + $0x38] sm:$0xff]
    %v71 = vld [vmem:[%s2 + $0x40] sm:$0xff]
    %v72 = vld [vmem:[%s2 + $0x48] sm:$0xff]
    %v73 = vld [vmem:[%s2 + $0x50] sm:$0xff]
    %v74 = vld [vmem:[%s2 + $0x58] sm:$0xff]
    %v75 = vld [vmem:[%s2 + $0x60] sm:$0xff]
    %v76 = vld [vmem:[%s2 + $0x68] sm:$0xff]
    %v77 = vld [vmem:[%s2 + $0x70] sm:$0xff]
    %v78 = vld [vmem:[%s2 + $0x78] sm:$0xff]
    %v79 = vand.u32 %v78, 4294901760
    %80 = vmatpush.msra.mxu0 %v79
    %v81 = vand.u32 %v77, 4294901760
    %82 = vmatpush.msra.mxu0 %v81
    %v83 = vand.u32 %v76, 4294901760
    %84 = vmatpush.msra.mxu0 %v83
    %v85 = vand.u32 %v75, 4294901760
    %86 = vmatpush.msra.mxu0 %v85
    %v87 = vand.u32 %v74, 4294901760
    %88 = vmatpush.msra.mxu0 %v87
    %v89 = vand.u32 %v73, 4294901760
    %90 = vmatpush.msra.mxu0 %v89
    %v91 = vand.u32 %v72, 4294901760
    %92 = vmatpush.msra.mxu0 %v91
    %v93 = vand.u32 %v71, 4294901760
    %94 = vmatpush.msra.mxu0 %v93
    %v95 = vand.u32 %v70, 4294901760
    %96 = vmatpush.msra.mxu0 %v95
    %v97 = vand.u32 %v69, 4294901760
    %98 = vmatpush.msra.mxu0 %v97
    %v99 = vand.u32 %v68, 4294901760
    %100 = vmatpush.msra.mxu0 %v99
    %v101 = vand.u32 %v67, 4294901760
    %102 = vmatpush.msra.mxu0 %v101
    %v103 = vand.u32 %v66, 4294901760
    %104 = vmatpush.msra.mxu0 %v103
    %v105 = vand.u32 %v65, 4294901760
    %106 = vmatpush.msra.mxu0 %v105
    %v107 = vand.u32 %v64, 4294901760
    %108 = vmatpush.msra.mxu0 %v107
    %v109 = vand.u32 %v63, 4294901760
    %110 = vmatpush.msra.mxu0 %v109
    %v111 = vand.u32 %v61, 4294901760
    %v112 = vsub.f32 %v61, %v111
    %v113 = vand.u32 %v112, 4294901760
    %v114 = vsub.f32 %v112, %v113
    %v115 = vand.u32 %v114, 4294901760
    %116 = vmatmul.f32.gmra.mxu0 %v115
    %v117 = vpop.f32.mrf.mxu0
    %v118 = vadd.f32 0.0, %v117
    %v119 = vand.u32 %v62, 4294901760
    %v120 = vsub.f32 %v62, %v119
    %v121 = vand.u32 %v120, 4294901760
    %v122 = vsub.f32 %v120, %v121
    %v123 = vand.u32 %v122, 4294901760
    %124 = vmatmul.f32.gmra.mxu0 %v123
    %v125 = vpop.f32.mrf.mxu0
    %v126 = vadd.f32 0.0, %v125
    %127 = vdwg.mxu0
    %v128 = vand.u32 %v78, 4294901760
    %v129 = vsub.f32 %v78, %v128
    %v130 = vand.u32 %v129, 4294901760
    %v131 = vsub.f32 %v129, %v130
    %v132 = vand.u32 %v131, 4294901760
    %133 = vmatpush.msra.mxu0 %v132
    %v134 = vand.u32 %v77, 4294901760
    %v135 = vsub.f32 %v77, %v134
    %v136 = vand.u32 %v135, 4294901760
    %v137 = vsub.f32 %v135, %v136
    %v138 = vand.u32 %v137, 4294901760
    %139 = vmatpush.msra.mxu0 %v138
    %v140 = vand.u32 %v76, 4294901760
    %v141 = vsub.f32 %v76, %v140
    %v142 = vand.u32 %v141, 4294901760
    %v143 = vsub.f32 %v141, %v142
    %v144 = vand.u32 %v143, 4294901760
    %145 = vmatpush.msra.mxu0 %v144
    %v146 = vand.u32 %v75, 4294901760
    %v147 = vsub.f32 %v75, %v146
    %v148 = vand.u32 %v147, 4294901760
    %v149 = vsub.f32 %v147, %v148
    %v150 = vand.u32 %v149, 4294901760
    %151 = vmatpush.msra.mxu0 %v150
    %v152 = vand.u32 %v74, 4294901760
    %v153 = vsub.f32 %v74, %v152
    %v154 = vand.u32 %v153, 4294901760
    %v155 = vsub.f32 %v153, %v154
    %v156 = vand.u32 %v155, 4294901760
    %157 = vmatpush.msra.mxu0 %v156
    %v158 = vand.u32 %v73, 4294901760
    %v159 = vsub.f32 %v73, %v158
    %v160 = vand.u32 %v159, 4294901760
    %v161 = vsub.f32 %v159, %v160
    %v162 = vand.u32 %v161, 4294901760
    %163 = vmatpush.msra.mxu0 %v162
    %v164 = vand.u32 %v72, 4294901760
    %v165 = vsub.f32 %v72, %v164
    %v166 = vand.u32 %v165, 4294901760
    %v167 = vsub.f32 %v165, %v166
    %v168 = vand.u32 %v167, 4294901760
    %169 = vmatpush.msra.mxu0 %v168
    %v170 = vand.u32 %v71, 4294901760
    %v171 = vsub.f32 %v71, %v170
    %v172 = vand.u32 %v171, 4294901760
    %v173 = vsub.f32 %v171, %v172
    %v174 = vand.u32 %v173, 4294901760
    %175 = vmatpush.msra.mxu0 %v174
    %v176 = vand.u32 %v70, 4294901760
    %v177 = vsub.f32 %v70, %v176
    %v178 = vand.u32 %v177, 4294901760
    %v179 = vsub.f32 %v177, %v178
    %v180 = vand.u32 %v179, 4294901760
    %181 = vmatpush.msra.mxu0 %v180
    %v182 = vand.u32 %v69, 4294901760
    %v183 = vsub.f32 %v69, %v182
    %v184 = vand.u32 %v183, 4294901760
    %v185 = vsub.f32 %v183, %v184
    %v186 = vand.u32 %v185, 4294901760
    %187 = vmatpush.msra.mxu0 %v186
    %v188 = vand.u32 %v68, 4294901760
    %v189 = vsub.f32 %v68, %v188
    %v190 = vand.u32 %v189, 4294901760
    %v191 = vsub.f32 %v189, %v190
    %v192 = vand.u32 %v191, 4294901760
    %193 = vmatpush.msra.mxu0 %v192
    %v194 = vand.u32 %v67, 4294901760
    %v195 = vsub.f32 %v67, %v194
    %v196 = vand.u32 %v195, 4294901760
    %v197 = vsub.f32 %v195, %v196
    %v198 = vand.u32 %v197, 4294901760
    %199 = vmatpush.msra.mxu0 %v198
    %v200 = vand.u32 %v66, 4294901760
    %v201 = vsub.f32 %v66, %v200
    %v202 = vand.u32 %v201, 4294901760
    %v203 = vsub.f32 %v201, %v202
    %v204 = vand.u32 %v203, 4294901760
    %205 = vmatpush.msra.mxu0 %v204
    %v206 = vand.u32 %v65, 4294901760
    %v207 = vsub.f32 %v65, %v206
    %v208 = vand.u32 %v207, 4294901760
    %v209 = vsub.f32 %v207, %v208
    %v210 = vand.u32 %v209, 4294901760
    %211 = vmatpush.msra.mxu0 %v210
    %v212 = vand.u32 %v64, 4294901760
    %v213 = vsub.f32 %v64, %v212
    %v214 = vand.u32 %v213, 4294901760
    %v215 = vsub.f32 %v213, %v214
    %v216 = vand.u32 %v215, 4294901760
    %217 = vmatpush.msra.mxu0 %v216
    %v218 = vand.u32 %v63, 4294901760
    %v219 = vsub.f32 %v63, %v218
    %v220 = vand.u32 %v219, 4294901760
    %v221 = vsub.f32 %v219, %v220
    %v222 = vand.u32 %v221, 4294901760
    %223 = vmatpush.msra.mxu0 %v222
    %v224 = vand.u32 %v61, 4294901760
    %225 = vmatmul.f32.gmra.mxu0 %v224
    %v226 = vpop.f32.mrf.mxu0
    %v227 = vadd.f32 %v118, %v226
    %v228 = vand.u32 %v62, 4294901760
    %229 = vmatmul.f32.gmra.mxu0 %v228
    %v230 = vpop.f32.mrf.mxu0
    %v231 = vadd.f32 %v126, %v230
    %232 = vdwg.mxu0
    %v233 = vand.u32 %v78, 4294901760
    %v234 = vsub.f32 %v78, %v233
    %235 = vmatpush.msra.mxu0 %v234
    %v236 = vand.u32 %v77, 4294901760
    %v237 = vsub.f32 %v77, %v236
    %238 = vmatpush.msra.mxu0 %v237
    %v239 = vand.u32 %v76, 4294901760
    %v240 = vsub.f32 %v76, %v239
    %241 = vmatpush.msra.mxu0 %v240
    %v242 = vand.u32 %v75, 4294901760
    %v243 = vsub.f32 %v75, %v242
    %244 = vmatpush.msra.mxu0 %v243
    %v245 = vand.u32 %v74, 4294901760
    %v246 = vsub.f32 %v74, %v245
    %247 = vmatpush.msra.mxu0 %v246
    %v248 = vand.u32 %v73, 4294901760
    %v249 = vsub.f32 %v73, %v248
    %250 = vmatpush.msra.mxu0 %v249
    %v251 = vand.u32 %v72, 4294901760
    %v252 = vsub.f32 %v72, %v251
    %253 = vmatpush.msra.mxu0 %v252
    %v254 = vand.u32 %v71, 4294901760
    %v255 = vsub.f32 %v71, %v254
    %256 = vmatpush.msra.mxu0 %v255
    %v257 = vand.u32 %v70, 4294901760
    %v258 = vsub.f32 %v70, %v257
    %259 = vmatpush.msra.mxu0 %v258
    %v260 = vand.u32 %v69, 4294901760
    %v261 = vsub.f32 %v69, %v260
    %262 = vmatpush.msra.mxu0 %v261
    %v263 = vand.u32 %v68, 4294901760
    %v264 = vsub.f32 %v68, %v263
    %265 = vmatpush.msra.mxu0 %v264
    %v266 = vand.u32 %v67, 4294901760
    %v267 = vsub.f32 %v67, %v266
    %268 = vmatpush.msra.mxu0 %v267
    %v269 = vand.u32 %v66, 4294901760
    %v270 = vsub.f32 %v66, %v269
    %271 = vmatpush.msra.mxu0 %v270
    %v272 = vand.u32 %v65, 4294901760
    %v273 = vsub.f32 %v65, %v272
    %274 = vmatpush.msra.mxu0 %v273
    %v275 = vand.u32 %v64, 4294901760
    %v276 = vsub.f32 %v64, %v275
    %277 = vmatpush.msra.mxu0 %v276
    %v278 = vand.u32 %v63, 4294901760
    %v279 = vsub.f32 %v63, %v278
    %280 = vmatpush.msra.mxu0 %v279
    %v281 = vand.u32 %v61, 4294901760
    %v282 = vsub.f32 %v61, %v281
    %283 = vmatmul.f32.gmra.mxu0 %v282
    %v284 = vpop.f32.mrf.mxu0
    %v285 = vadd.f32 %v227, %v284
    %v286 = vand.u32 %v62, 4294901760
    %v287 = vsub.f32 %v62, %v286
    %288 = vmatmul.f32.gmra.mxu0 %v287
    %v289 = vpop.f32.mrf.mxu0
    %v290 = vadd.f32 %v231, %v289
    %291 = vdwg.mxu0
    %v292 = vand.u32 %v78, 4294901760
    %293 = vmatpush.msra.mxu0 %v292
    %v294 = vand.u32 %v77, 4294901760
    %295 = vmatpush.msra.mxu0 %v294
    %v296 = vand.u32 %v76, 4294901760
    %297 = vmatpush.msra.mxu0 %v296
    %v298 = vand.u32 %v75, 4294901760
    %299 = vmatpush.msra.mxu0 %v298
    %v300 = vand.u32 %v74, 4294901760
    %301 = vmatpush.msra.mxu0 %v300
    %v302 = vand.u32 %v73, 4294901760
    %303 = vmatpush.msra.mxu0 %v302
    %v304 = vand.u32 %v72, 4294901760
    %305 = vmatpush.msra.mxu0 %v304
    %v306 = vand.u32 %v71, 4294901760
    %307 = vmatpush.msra.mxu0 %v306
    %v308 = vand.u32 %v70, 4294901760
    %309 = vmatpush.msra.mxu0 %v308
    %v310 = vand.u32 %v69, 4294901760
    %311 = vmatpush.msra.mxu0 %v310
    %v312 = vand.u32 %v68, 4294901760
    %313 = vmatpush.msra.mxu0 %v312
    %v314 = vand.u32 %v67, 4294901760
    %315 = vmatpush.msra.mxu0 %v314
    %v316 = vand.u32 %v66, 4294901760
    %317 = vmatpush.msra.mxu0 %v316
    %v318 = vand.u32 %v65, 4294901760
    %319 = vmatpush.msra.mxu0 %v318
    %v320 = vand.u32 %v64, 4294901760
    %321 = vmatpush.msra.mxu0 %v320
    %v322 = vand.u32 %v63, 4294901760
    %323 = vmatpush.msra.mxu0 %v322
    %v324 = vand.u32 %v61, 4294901760
    %v325 = vsub.f32 %v61, %v324
    %v326 = vand.u32 %v325, 4294901760
    %327 = vmatmul.f32.gmra.mxu0 %v326
    %v328 = vpop.f32.mrf.mxu0
    %v329 = vadd.f32 %v285, %v328
    %v330 = vand.u32 %v62, 4294901760
    %v331 = vsub.f32 %v62, %v330
    %v332 = vand.u32 %v331, 4294901760
    %333 = vmatmul.f32.gmra.mxu0 %v332
    %v334 = vpop.f32.mrf.mxu0
    %v335 = vadd.f32 %v290, %v334
    %336 = vdwg.mxu0
    %v337 = vand.u32 %v78, 4294901760
    %v338 = vsub.f32 %v78, %v337
    %v339 = vand.u32 %v338, 4294901760
    %340 = vmatpush.msra.mxu0 %v339
    %v341 = vand.u32 %v77, 4294901760
    %v342 = vsub.f32 %v77, %v341
    %v343 = vand.u32 %v342, 4294901760
    %344 = vmatpush.msra.mxu0 %v343
    %v345 = vand.u32 %v76, 4294901760
    %v346 = vsub.f32 %v76, %v345
    %v347 = vand.u32 %v346, 4294901760
    %348 = vmatpush.msra.mxu0 %v347
    %v349 = vand.u32 %v75, 4294901760
    %v350 = vsub.f32 %v75, %v349
    %v351 = vand.u32 %v350, 4294901760
    %352 = vmatpush.msra.mxu0 %v351
    %v353 = vand.u32 %v74, 4294901760
    %v354 = vsub.f32 %v74, %v353
    %v355 = vand.u32 %v354, 4294901760
    %356 = vmatpush.msra.mxu0 %v355
    %v357 = vand.u32 %v73, 4294901760
    %v358 = vsub.f32 %v73, %v357
    %v359 = vand.u32 %v358, 4294901760
    %360 = vmatpush.msra.mxu0 %v359
    %v361 = vand.u32 %v72, 4294901760
    %v362 = vsub.f32 %v72, %v361
    %v363 = vand.u32 %v362, 4294901760
    %364 = vmatpush.msra.mxu0 %v363
    %v365 = vand.u32 %v71, 4294901760
    %v366 = vsub.f32 %v71, %v365
    %v367 = vand.u32 %v366, 4294901760
    %368 = vmatpush.msra.mxu0 %v367
    %v369 = vand.u32 %v70, 4294901760
    %v370 = vsub.f32 %v70, %v369
    %v371 = vand.u32 %v370, 4294901760
    %372 = vmatpush.msra.mxu0 %v371
    %v373 = vand.u32 %v69, 4294901760
    %v374 = vsub.f32 %v69, %v373
    %v375 = vand.u32 %v374, 4294901760
    %376 = vmatpush.msra.mxu0 %v375
    %v377 = vand.u32 %v68, 4294901760
    %v378 = vsub.f32 %v68, %v377
    %v379 = vand.u32 %v378, 4294901760
    %380 = vmatpush.msra.mxu0 %v379
    %v381 = vand.u32 %v67, 4294901760
    %v382 = vsub.f32 %v67, %v381
    %v383 = vand.u32 %v382, 4294901760
    %384 = vmatpush.msra.mxu0 %v383
    %v385 = vand.u32 %v66, 4294901760
    %v386 = vsub.f32 %v66, %v385
    %v387 = vand.u32 %v386, 4294901760
    %388 = vmatpush.msra.mxu0 %v387
    %v389 = vand.u32 %v65, 4294901760
    %v390 = vsub.f32 %v65, %v389
    %v391 = vand.u32 %v390, 4294901760
    %392 = vmatpush.msra.mxu0 %v391
    %v393 = vand.u32 %v64, 4294901760
    %v394 = vsub.f32 %v64, %v393
    %v395 = vand.u32 %v394, 4294901760
    %396 = vmatpush.msra.mxu0 %v395
    %v397 = vand.u32 %v63, 4294901760
    %v398 = vsub.f32 %v63, %v397
    %v399 = vand.u32 %v398, 4294901760
    %400 = vmatpush.msra.mxu0 %v399
    %v401 = vand.u32 %v61, 4294901760
    %402 = vmatmul.f32.gmra.mxu0 %v401
    %v403 = vpop.f32.mrf.mxu0
    %v404 = vadd.f32 %v329, %v403
    %v405 = vand.u32 %v62, 4294901760
    %406 = vmatmul.f32.gmra.mxu0 %v405
    %v407 = vpop.f32.mrf.mxu0
    %v408 = vadd.f32 %v335, %v407
    %409 = vdwg.mxu0
    %v410 = vand.u32 %v78, 4294901760
    %411 = vmatpush.msra.mxu0 %v410
    %v412 = vand.u32 %v77, 4294901760
    %413 = vmatpush.msra.mxu0 %v412
    %v414 = vand.u32 %v76, 4294901760
    %415 = vmatpush.msra.mxu0 %v414
    %v416 = vand.u32 %v75, 4294901760
    %417 = vmatpush.msra.mxu0 %v416
    %v418 = vand.u32 %v74, 4294901760
    %419 = vmatpush.msra.mxu0 %v418
    %v420 = vand.u32 %v73, 4294901760
    %421 = vmatpush.msra.mxu0 %v420
    %v422 = vand.u32 %v72, 4294901760
    %423 = vmatpush.msra.mxu0 %v422
    %v424 = vand.u32 %v71, 4294901760
    %425 = vmatpush.msra.mxu0 %v424
    %v426 = vand.u32 %v70, 4294901760
    %427 = vmatpush.msra.mxu0 %v426
    %v428 = vand.u32 %v69, 4294901760
    %429 = vmatpush.msra.mxu0 %v428
    %v430 = vand.u32 %v68, 4294901760
    %431 = vmatpush.msra.mxu0 %v430
    %v432 = vand.u32 %v67, 4294901760
    %433 = vmatpush.msra.mxu0 %v432
    %v434 = vand.u32 %v66, 4294901760
    %435 = vmatpush.msra.mxu0 %v434
    %v436 = vand.u32 %v65, 4294901760
    %437 = vmatpush.msra.mxu0 %v436
    %v438 = vand.u32 %v64, 4294901760
    %439 = vmatpush.msra.mxu0 %v438
    %v440 = vand.u32 %v63, 4294901760
    %441 = vmatpush.msra.mxu0 %v440
    %v442 = vand.u32 %v61, 4294901760
    %443 = vmatmul.f32.gmra.mxu0 %v442
    %v444 = vpop.f32.mrf.mxu0
    %v445 = vadd.f32 %v404, %v444
    %v446 = vand.u32 %v62, 4294901760
    %447 = vmatmul.f32.gmra.mxu0 %v446
    %v448 = vpop.f32.mrf.mxu0
    %v449 = vadd.f32 %v408, %v448
    %450 = vdwg.mxu0
    %vm451 = vcmp.gt.f32.partialorder %v445, 20.0
    %vm452 = vcmp.gt.f32.partialorder %v449, 20.0
    %v453 = vmin.f32 %v445, 20.0
    %v454 = vmin.f32 %v449, 20.0
    %v455 = vmul.f32 %v453, 1.442695
    %v456 = vpow.pop %v455
    %v457 = vmul.f32 %v454, 1.442695
    %v458 = vpow.pop %v457
    %v459 = vadd.f32 %v456, 1.0
    %v460 = vadd.f32 %v458, 1.0
    %v461 = vlog2.pop %v459
    %v462 = vmul.f32 %v461, 0.6931472
    %v463 = vlog2.pop %v460
    %v464 = vmul.f32 %v463, 0.6931472
    %v465 = vsel %vm451, %v445, %v462
    %v466 = vsel %vm452, %v449, %v464
    %v467 = vld [vmem:[%s1] sm:$0xff]
    %v468 = vld [vmem:[%s1 + $0x8] sm:$0xff]
    %471 = vrot.lane.b32.xlu0 %v465, 124
    %v472 = vpop.permute.xlu0 %471
    %473 = vrot.lane.b32.xlu0 %v466, 124
    %v474 = vpop.permute.xlu0 %473
    %v477 = vmul.f32 %v467, %v472
    %v478 = vmul.f32 %v468, %v474
    %v479 = vadd.f32 %v477, %v445
    %v480 = vadd.f32 %v478, %v449
    %v481 = vld [vmem:[%s3] sm:$0x1]
    %v483 = vperm.slane %v481, 0
    %v485 = vadd.f32 %v479, %v483
    %v486 = vadd.f32 %v480, %v483
    %v487 = vlaneseq
    %v488 = vand.u32 %v487, 127
    %vm489 = vcmp.lt.s32.totalorder %v488, 0
    %v490 = vsel %vm489, -1e+30, %v485
    %v491 = vsel %vm489, -1e+30, %v486
    %vm492 = vcmask 31744
    %v493 = vsel %vm492, %v490, -inf
    %494 = vmax.xlane.f32.xlu0 %v493
    %v495 = vpop.xlane.xlu0 %494
    %v496 = vsel %vm492, %v491, -inf
    %497 = vmax.xlane.f32.xlu0 %v496
    %v498 = vpop.xlane.xlu0 %497
    %vm499 = vcmp.eq.f32.partialorder %v490, %v495
    %vm500 = vcmp.eq.f32.partialorder %v491, %v498
    %v501 = vsel %vm499, %v488, 4
    %v502 = vsel %vm500, %v488, 4
    %v503 = vsel %vm492, %v501, 2147483647
    %v504 = vand.u32 %v503, 65535
    %v505 = vshra.s32 %v503, 16
    %v506 = vcvt.s32.f32 %v504
    %v507 = vcvt.s32.f32 %v505
    %508 = vmin.xlane.f32.xlu0 %v507
    %v509 = vpop.xlane.xlu0 %508
    %vm510 = vcmp.eq.f32.partialorder %v507, %v509
    %v511 = vsel %vm510, %v506, inf
    %512 = vmin.xlane.f32.xlu0 %v511
    %v513 = vpop.xlane.xlu0 %512
    %v514 = vcvt.f32.s32 %v513
    %v515 = vcvt.f32.s32 %v509
    %v516 = vshll.u32 %v515, 16
    %v517 = vadd.s32 %v516, %v514
    %v518 = vsel %vm492, %v502, 2147483647
    %v519 = vand.u32 %v518, 65535
    %v520 = vshra.s32 %v518, 16
    %v521 = vcvt.s32.f32 %v519
    %v522 = vcvt.s32.f32 %v520
    %523 = vmin.xlane.f32.xlu0 %v522
    %v524 = vpop.xlane.xlu0 %523
    %vm525 = vcmp.eq.f32.partialorder %v522, %v524
    %v526 = vsel %vm525, %v521, inf
    %527 = vmin.xlane.f32.xlu0 %v526
    %v528 = vpop.xlane.xlu0 %527
    %v529 = vcvt.f32.s32 %v528
    %v530 = vcvt.f32.s32 %v524
    %v531 = vshll.u32 %v530, 16
    %v532 = vadd.s32 %v531, %v529
    %vm533 = vcmp.eq.s32.totalorder %v488, %v517
    %vm534 = vcmp.eq.s32.totalorder %v488, %v532
    %vm535 = vmor %vm489, %vm533
    %vm536 = vmor %vm489, %vm534
    %v537 = vsel %vm535, -1e+30, %v485
    %v538 = vsel %vm536, -1e+30, %v486
    %v539 = vsel %vm492, %v537, -inf
    %540 = vmax.xlane.f32.xlu0 %v539
    %v541 = vpop.xlane.xlu0 %540
    %v542 = vsel %vm492, %v538, -inf
    %543 = vmax.xlane.f32.xlu0 %v542
    %v544 = vpop.xlane.xlu0 %543
    %vm545 = vcmp.eq.f32.partialorder %v537, %v541
    %vm546 = vcmp.eq.f32.partialorder %v538, %v544
    %v547 = vsel %vm545, %v488, 4
    %v548 = vsel %vm546, %v488, 4
    %v549 = vsel %vm492, %v547, 2147483647
    %v550 = vand.u32 %v549, 65535
    %v551 = vshra.s32 %v549, 16
    %v552 = vcvt.s32.f32 %v550
    %v553 = vcvt.s32.f32 %v551
    %554 = vmin.xlane.f32.xlu0 %v553
    %v555 = vpop.xlane.xlu0 %554
    %vm556 = vcmp.eq.f32.partialorder %v553, %v555
    %v557 = vsel %vm556, %v552, inf
    %558 = vmin.xlane.f32.xlu0 %v557
    %v559 = vpop.xlane.xlu0 %558
    %v560 = vcvt.f32.s32 %v559
    %v561 = vcvt.f32.s32 %v555
    %v562 = vshll.u32 %v561, 16
    %v563 = vadd.s32 %v562, %v560
    %v564 = vsel %vm492, %v548, 2147483647
    %v565 = vand.u32 %v564, 65535
    %v566 = vshra.s32 %v564, 16
    %v567 = vcvt.s32.f32 %v565
    %v568 = vcvt.s32.f32 %v566
    %569 = vmin.xlane.f32.xlu0 %v568
    %v570 = vpop.xlane.xlu0 %569
    %vm571 = vcmp.eq.f32.partialorder %v568, %v570
    %v572 = vsel %vm571, %v567, inf
    %573 = vmin.xlane.f32.xlu0 %v572
    %v574 = vpop.xlane.xlu0 %573
    %v575 = vcvt.f32.s32 %v574
    %v576 = vcvt.f32.s32 %v570
    %v577 = vshll.u32 %v576, 16
    %v578 = vadd.s32 %v577, %v575
    %vm579 = vcmp.eq.s32.totalorder %v488, %v563
    %vm580 = vcmp.eq.s32.totalorder %v488, %v578
    %vm581 = vmor %vm535, %vm579
    %vm582 = vmor %vm536, %vm580
    %v583 = vsel %vm581, %v485, -1e+30
    %v584 = vsel %vm582, %v486, -1e+30
    %v585 = vsel %vm492, %v583, -inf
    %586 = vmax.xlane.f32.xlu0 %v585
    %v587 = vpop.xlane.xlu0 %586
    %v588 = vsel %vm492, %v584, -inf
    %589 = vmax.xlane.f32.xlu0 %v588
    %v590 = vpop.xlane.xlu0 %589
    %v591 = vsub.f32 %v583, %v587
    %v592 = vsub.f32 %v584, %v590
    %v593 = vmul.f32 %v591, 1.442695
    %v594 = vpow.pop %v593
    %v595 = vmul.f32 %v592, 1.442695
    %v596 = vpow.pop %v595
    %v597 = vsel %vm492, %v594, 0.0
    %598 = vadd.xlane.f32.xlu0 %v597
    %v599 = vpop.xlane.xlu0 %598
    %v600 = vsel %vm492, %v596, 0.0
    %601 = vadd.xlane.f32.xlu0 %v600
    %v602 = vpop.xlane.xlu0 %601
    %v603 = vrcp.pop %v599
    %v604 = vmul.f32 %v599, %v603
    %v605 = vsub.f32 1.0, %v604
    %v606 = vmul.f32 %v603, %v605
    %v607 = vadd.f32 %v603, %v606
    %vm608 = vweird.f32 %v599
    %vm609 = vweird.f32 %v603
    %vm610 = vmor %vm608, %vm609
    %v611 = vsel %vm610, %v603, %v607
    %v612 = vand.u32 2147483647, %v599
    %vm613 = vcmp.eq.f32.partialorder %v612, 8.507059e+37
    %v614 = vand.u32 %v599, 2147483648
    %v615 = vor.u32 1.1754944e-38, %v614
    %v616 = vsel %vm613, %v615, %v611
    %v617 = vmul.f32 %v594, %v616
    %v618 = vrcp.pop %v602
    %v619 = vmul.f32 %v602, %v618
    %v620 = vsub.f32 1.0, %v619
    %v621 = vmul.f32 %v618, %v620
    %v622 = vadd.f32 %v618, %v621
    %vm623 = vweird.f32 %v602
    %vm624 = vweird.f32 %v618
    %vm625 = vmor %vm623, %vm624
    %v626 = vsel %vm625, %v618, %v622
    %v627 = vand.u32 2147483647, %v602
    %vm628 = vcmp.eq.f32.partialorder %v627, 8.507059e+37
    %v629 = vand.u32 %v602, 2147483648
    %v630 = vor.u32 1.1754944e-38, %v629
    %v631 = vsel %vm628, %v630, %v626
    %v632 = vmul.f32 %v596, %v631
    %v633 = vpack.c.bf16 %v62, %v61
    %v634 = vld [vmem:[#allocation2] sm:$0xff]
    %v635 = vld [vmem:[#allocation2 + $0x8] sm:$0xff]
    %v636 = vld [vmem:[#allocation2 + $0x10] sm:$0xff]
    %v637 = vld [vmem:[#allocation2 + $0x18] sm:$0xff]
    %v638 = vld [vmem:[#allocation2 + $0x20] sm:$0xff]
    %v639 = vld [vmem:[#allocation2 + $0x28] sm:$0xff]
    %v640 = vld [vmem:[#allocation2 + $0x30] sm:$0xff]
    %v641 = vld [vmem:[#allocation2 + $0x38] sm:$0xff]
    %v642 = vld [vmem:[#allocation2 + $0x40] sm:$0xff]
    %v643 = vld [vmem:[#allocation2 + $0x48] sm:$0xff]
    %v644 = vld [vmem:[#allocation2 + $0x50] sm:$0xff]
    %v645 = vld [vmem:[#allocation2 + $0x58] sm:$0xff]
    %v646 = vld [vmem:[#allocation2 + $0x60] sm:$0xff]
    %v647 = vld [vmem:[#allocation2 + $0x68] sm:$0xff]
    %v648 = vld [vmem:[#allocation2 + $0x70] sm:$0xff]
    %v649 = vld [vmem:[#allocation2 + $0x78] sm:$0xff]
    %v650 = vld [vmem:[#allocation2 + $0x80] sm:$0xff]
    %v651 = vld [vmem:[#allocation2 + $0x88] sm:$0xff]
    %v652 = vld [vmem:[#allocation2 + $0x90] sm:$0xff]
    %v653 = vld [vmem:[#allocation2 + $0x98] sm:$0xff]
    %v654 = vld [vmem:[#allocation2 + $0xa0] sm:$0xff]
    %v655 = vld [vmem:[#allocation2 + $0xa8] sm:$0xff]
    %v656 = vld [vmem:[#allocation2 + $0xb0] sm:$0xff]
    %v657 = vld [vmem:[#allocation2 + $0xb8] sm:$0xff]
    %v658 = vld [vmem:[#allocation2 + $0xc0] sm:$0xff]
    %v659 = vld [vmem:[#allocation2 + $0xc8] sm:$0xff]
    %v660 = vld [vmem:[#allocation2 + $0xd0] sm:$0xff]
    %v661 = vld [vmem:[#allocation2 + $0xd8] sm:$0xff]
    %v662 = vld [vmem:[#allocation2 + $0xe0] sm:$0xff]
    %v663 = vld [vmem:[#allocation2 + $0xe8] sm:$0xff]
    %v664 = vld [vmem:[#allocation2 + $0xf0] sm:$0xff]
    %v665 = vld [vmem:[#allocation2 + $0xf8] sm:$0xff]
    %v666 = vld [vmem:[%s5] sm:$0xf]
    %v668 = vperm.slane %v666, 0
    %v669 = vperm.slane %v666, 1
    %v670 = vperm.slane %v666, 2
    %v671 = vperm.slane %v666, 3
    %v708 = vunpack.c.l.b16 %v634
    %v709 = vunpack.c.h.b16 %v634
    %v710 = vunpack.c.l.b16 %v635
    %v711 = vunpack.c.h.b16 %v635
    %v712 = vunpack.c.l.b16 %v636
    %v713 = vunpack.c.h.b16 %v636
    %v714 = vunpack.c.l.b16 %v637
    %v715 = vunpack.c.h.b16 %v637
    %v716 = vunpack.c.l.b16 %v638
    %v717 = vunpack.c.h.b16 %v638
    %v718 = vunpack.c.l.b16 %v639
    %v719 = vunpack.c.h.b16 %v639
    %v720 = vunpack.c.l.b16 %v640
    %v721 = vunpack.c.h.b16 %v640
    %v722 = vunpack.c.l.b16 %v641
    %v723 = vunpack.c.h.b16 %v641
    %v724 = vunpack.c.l.b16 %v642
    %v725 = vunpack.c.h.b16 %v642
    %v726 = vunpack.c.l.b16 %v643
    %v727 = vunpack.c.h.b16 %v643
    %v728 = vunpack.c.l.b16 %v644
    %v729 = vunpack.c.h.b16 %v644
    %v730 = vunpack.c.l.b16 %v645
    %v731 = vunpack.c.h.b16 %v645
    %v732 = vunpack.c.l.b16 %v646
    %v733 = vunpack.c.h.b16 %v646
    %v734 = vunpack.c.l.b16 %v647
    %v735 = vunpack.c.h.b16 %v647
    %v736 = vunpack.c.l.b16 %v648
    %v737 = vunpack.c.h.b16 %v648
    %v738 = vunpack.c.l.b16 %v649
    %v739 = vunpack.c.h.b16 %v649
    %v740 = vunpack.c.l.b16 %v650
    %v741 = vunpack.c.h.b16 %v650
    %v742 = vunpack.c.l.b16 %v651
    %v743 = vunpack.c.h.b16 %v651
    %v744 = vunpack.c.l.b16 %v652
    %v745 = vunpack.c.h.b16 %v652
    %v746 = vunpack.c.l.b16 %v653
    %v747 = vunpack.c.h.b16 %v653
    %v748 = vunpack.c.l.b16 %v654
    %v749 = vunpack.c.h.b16 %v654
    %v750 = vunpack.c.l.b16 %v655
    %v751 = vunpack.c.h.b16 %v655
    %v752 = vunpack.c.l.b16 %v656
    %v753 = vunpack.c.h.b16 %v656
    %v754 = vunpack.c.l.b16 %v657
    %v755 = vunpack.c.h.b16 %v657
    %v756 = vunpack.c.l.b16 %v658
    %v757 = vunpack.c.h.b16 %v658
    %v758 = vunpack.c.l.b16 %v659
    %v759 = vunpack.c.h.b16 %v659
    %v760 = vunpack.c.l.b16 %v660
    %v761 = vunpack.c.h.b16 %v660
    %v762 = vunpack.c.l.b16 %v661
    %v763 = vunpack.c.h.b16 %v661
    %v764 = vunpack.c.l.b16 %v662
    %v765 = vunpack.c.h.b16 %v662
    %v766 = vunpack.c.l.b16 %v663
    %v767 = vunpack.c.h.b16 %v663
    %v768 = vunpack.c.l.b16 %v664
    %v769 = vunpack.c.h.b16 %v664
    %v770 = vunpack.c.l.b16 %v665
    %v771 = vunpack.c.h.b16 %v665
    %v772 = vpack.c.b16 %v712, %v708
    %v773 = vpack.c.b16 %v713, %v709
    %v774 = vpack.c.b16 %v714, %v710
    %v775 = vpack.c.b16 %v715, %v711
    %v776 = vpack.c.b16 %v720, %v716
    %v777 = vpack.c.b16 %v721, %v717
    %v778 = vpack.c.b16 %v722, %v718
    %v779 = vpack.c.b16 %v723, %v719
    %v780 = vpack.c.b16 %v728, %v724
    %v781 = vpack.c.b16 %v729, %v725
    %v782 = vpack.c.b16 %v730, %v726
    %v783 = vpack.c.b16 %v731, %v727
    %v784 = vpack.c.b16 %v736, %v732
    %v785 = vpack.c.b16 %v737, %v733
    %v786 = vpack.c.b16 %v738, %v734
    %v787 = vpack.c.b16 %v739, %v735
    %v788 = vpack.c.b16 %v744, %v740
    %v789 = vpack.c.b16 %v745, %v741
    %v790 = vpack.c.b16 %v746, %v742
    %v791 = vpack.c.b16 %v747, %v743
    %v792 = vpack.c.b16 %v752, %v748
    %v793 = vpack.c.b16 %v753, %v749
    %v794 = vpack.c.b16 %v754, %v750
    %v795 = vpack.c.b16 %v755, %v751
    %v796 = vpack.c.b16 %v760, %v756
    %v797 = vpack.c.b16 %v761, %v757
    %v798 = vpack.c.b16 %v762, %v758
    %v799 = vpack.c.b16 %v763, %v759
    %v800 = vpack.c.b16 %v768, %v764
    %v801 = vpack.c.b16 %v769, %v765
    %v802 = vpack.c.b16 %v770, %v766
    %v803 = vpack.c.b16 %v771, %v767
    %836 = vmatpush.bf16.msra.mxu0 %v800
    %837 = vmatpush.bf16.msra.mxu0 %v796
    %838 = vmatpush.bf16.msra.mxu0 %v792
    %839 = vmatpush.bf16.msra.mxu0 %v788
    %840 = vmatpush.bf16.msra.mxu0 %v784
    %841 = vmatpush.bf16.msra.mxu0 %v780
    %842 = vmatpush.bf16.msra.mxu0 %v776
    %843 = vmatpush.bf16.msra.mxu0 %v772
    %844 = vmatmul.bf16.gmra.mxu0 %v633
    %v845 = vpop.f32.mrf.mxu0
    %v846 = vadd.f32 %v668, %v845
    %v847 = vpop.f32.mrf.mxu0
    %v848 = vadd.f32 %v668, %v847
    %849 = vdwg.mxu0
    %850 = vmatpush.bf16.msra.mxu0 %v801
    %851 = vmatpush.bf16.msra.mxu0 %v797
    %852 = vmatpush.bf16.msra.mxu0 %v793
    %853 = vmatpush.bf16.msra.mxu0 %v789
    %854 = vmatpush.bf16.msra.mxu0 %v785
    %855 = vmatpush.bf16.msra.mxu0 %v781
    %856 = vmatpush.bf16.msra.mxu0 %v777
    %857 = vmatpush.bf16.msra.mxu0 %v773
    %858 = vmatmul.bf16.gmra.mxu0 %v633
    %v859 = vpop.f32.mrf.mxu0
    %v860 = vadd.f32 %v669, %v859
    %v861 = vpop.f32.mrf.mxu0
    %v862 = vadd.f32 %v669, %v861
    %863 = vdwg.mxu0
    %864 = vmatpush.bf16.msra.mxu0 %v802
    %865 = vmatpush.bf16.msra.mxu0 %v798
    %866 = vmatpush.bf16.msra.mxu0 %v794
    %867 = vmatpush.bf16.msra.mxu0 %v790
    %868 = vmatpush.bf16.msra.mxu0 %v786
    %869 = vmatpush.bf16.msra.mxu0 %v782
    %870 = vmatpush.bf16.msra.mxu0 %v778
    %871 = vmatpush.bf16.msra.mxu0 %v774
    %872 = vmatmul.bf16.gmra.mxu0 %v633
    %v873 = vpop.f32.mrf.mxu0
    %v874 = vadd.f32 %v670, %v873
    %v875 = vpop.f32.mrf.mxu0
    %v876 = vadd.f32 %v670, %v875
    %877 = vdwg.mxu0
    %878 = vmatpush.bf16.msra.mxu0 %v803
    %879 = vmatpush.bf16.msra.mxu0 %v799
    %880 = vmatpush.bf16.msra.mxu0 %v795
    %881 = vmatpush.bf16.msra.mxu0 %v791
    %882 = vmatpush.bf16.msra.mxu0 %v787
    %883 = vmatpush.bf16.msra.mxu0 %v783
    %884 = vmatpush.bf16.msra.mxu0 %v779
    %885 = vmatpush.bf16.msra.mxu0 %v775
    %886 = vmatmul.bf16.gmra.mxu0 %v633
    %v887 = vpop.f32.mrf.mxu0
    %v888 = vadd.f32 %v671, %v887
    %v889 = vpop.f32.mrf.mxu0
    %v890 = vadd.f32 %v671, %v889
    %891 = vdwg.mxu0
    %v892 = vmul.f32 %v846, 0.70710677
    %v893 = vmul.f32 %v860, 0.70710677
    %v894 = vmul.f32 %v874, 0.70710677
    %v895 = vmul.f32 %v888, 0.70710677
    %v896 = vmul.f32 %v848, 0.70710677
    %v897 = vmul.f32 %v862, 0.70710677
    %v898 = vmul.f32 %v876, 0.70710677
    %v899 = vmul.f32 %v890, 0.70710677
    %v900 = vand.u32 2147483647, %v892
    %v901 = vand.u32 2147483647, %v893
    %v902 = vand.u32 2147483647, %v894
    %v903 = vand.u32 2147483647, %v895
    %v904 = vand.u32 2147483647, %v896
    %v905 = vand.u32 2147483647, %v897
    %v906 = vand.u32 2147483647, %v898
    %v907 = vand.u32 2147483647, %v899
    %v908 = vmul.f32 %v900, 0.3275911
    %v909 = vmul.f32 %v901, 0.3275911
    %v910 = vmul.f32 %v902, 0.3275911
    %v911 = vmul.f32 %v903, 0.3275911
    %v912 = vmul.f32 %v904, 0.3275911
    %v913 = vmul.f32 %v905, 0.3275911
    %v914 = vmul.f32 %v906, 0.3275911
    %v915 = vmul.f32 %v907, 0.3275911
    %v916 = vadd.f32 %v908, 1.0
    %v917 = vadd.f32 %v909, 1.0
    %v918 = vadd.f32 %v910, 1.0
    %v919 = vadd.f32 %v911, 1.0
    %v920 = vadd.f32 %v912, 1.0
    %v921 = vadd.f32 %v913, 1.0
    %v922 = vadd.f32 %v914, 1.0
    %v923 = vadd.f32 %v915, 1.0
    %v924 = vrcp.pop %v916
    %v925 = vmul.f32 %v916, %v924
    %v926 = vsub.f32 1.0, %v925
    %v927 = vmul.f32 %v924, %v926
    %v928 = vadd.f32 %v924, %v927
    %vm929 = vweird.f32 %v916
    %vm930 = vweird.f32 %v924
    %vm931 = vmor %vm929, %vm930
    %v932 = vsel %vm931, %v924, %v928
    %v933 = vand.u32 2147483647, %v916
    %vm934 = vcmp.eq.f32.partialorder %v933, 8.507059e+37
    %v935 = vand.u32 %v916, 2147483648
    %v936 = vor.u32 1.1754944e-38, %v935
    %v937 = vsel %vm934, %v936, %v932
    %v938 = vmul.f32 1.0, %v937
    %v939 = vrcp.pop %v917
    %v940 = vmul.f32 %v917, %v939
    %v941 = vsub.f32 1.0, %v940
    %v942 = vmul.f32 %v939, %v941
    %v943 = vadd.f32 %v939, %v942
    %vm944 = vweird.f32 %v917
    %vm945 = vweird.f32 %v939
    %vm946 = vmor %vm944, %vm945
    %v947 = vsel %vm946, %v939, %v943
    %v948 = vand.u32 2147483647, %v917
    %vm949 = vcmp.eq.f32.partialorder %v948, 8.507059e+37
    %v950 = vand.u32 %v917, 2147483648
    %v951 = vor.u32 1.1754944e-38, %v950
    %v952 = vsel %vm949, %v951, %v947
    %v953 = vmul.f32 1.0, %v952
    %v954 = vrcp.pop %v918
    %v955 = vmul.f32 %v918, %v954
    %v956 = vsub.f32 1.0, %v955
    %v957 = vmul.f32 %v954, %v956
    %v958 = vadd.f32 %v954, %v957
    %vm959 = vweird.f32 %v918
    %vm960 = vweird.f32 %v954
    %vm961 = vmor %vm959, %vm960
    %v962 = vsel %vm961, %v954, %v958
    %v963 = vand.u32 2147483647, %v918
    %vm964 = vcmp.eq.f32.partialorder %v963, 8.507059e+37
    %v965 = vand.u32 %v918, 2147483648
    %v966 = vor.u32 1.1754944e-38, %v965
    %v967 = vsel %vm964, %v966, %v962
    %v968 = vmul.f32 1.0, %v967
    %v969 = vrcp.pop %v919
    %v970 = vmul.f32 %v919, %v969
    %v971 = vsub.f32 1.0, %v970
    %v972 = vmul.f32 %v969, %v971
    %v973 = vadd.f32 %v969, %v972
    %vm974 = vweird.f32 %v919
    %vm975 = vweird.f32 %v969
    %vm976 = vmor %vm974, %vm975
    %v977 = vsel %vm976, %v969, %v973
    %v978 = vand.u32 2147483647, %v919
    %vm979 = vcmp.eq.f32.partialorder %v978, 8.507059e+37
    %v980 = vand.u32 %v919, 2147483648
    %v981 = vor.u32 1.1754944e-38, %v980
    %v982 = vsel %vm979, %v981, %v977
    %v983 = vmul.f32 1.0, %v982
    %v984 = vrcp.pop %v920
    %v985 = vmul.f32 %v920, %v984
    %v986 = vsub.f32 1.0, %v985
    %v987 = vmul.f32 %v984, %v986
    %v988 = vadd.f32 %v984, %v987
    %vm989 = vweird.f32 %v920
    %vm990 = vweird.f32 %v984
    %vm991 = vmor %vm989, %vm990
    %v992 = vsel %vm991, %v984, %v988
    %v993 = vand.u32 2147483647, %v920
    %vm994 = vcmp.eq.f32.partialorder %v993, 8.507059e+37
    %v995 = vand.u32 %v920, 2147483648
    %v996 = vor.u32 1.1754944e-38, %v995
    %v997 = vsel %vm994, %v996, %v992
    %v998 = vmul.f32 1.0, %v997
    %v999 = vrcp.pop %v921
    %v1000 = vmul.f32 %v921, %v999
    %v1001 = vsub.f32 1.0, %v1000
    %v1002 = vmul.f32 %v999, %v1001
    %v1003 = vadd.f32 %v999, %v1002
    %vm1004 = vweird.f32 %v921
    %vm1005 = vweird.f32 %v999
    %vm1006 = vmor %vm1004, %vm1005
    %v1007 = vsel %vm1006, %v999, %v1003
    %v1008 = vand.u32 2147483647, %v921
    %vm1009 = vcmp.eq.f32.partialorder %v1008, 8.507059e+37
    %v1010 = vand.u32 %v921, 2147483648
    %v1011 = vor.u32 1.1754944e-38, %v1010
    %v1012 = vsel %vm1009, %v1011, %v1007
    %v1013 = vmul.f32 1.0, %v1012
    %v1014 = vrcp.pop %v922
    %v1015 = vmul.f32 %v922, %v1014
    %v1016 = vsub.f32 1.0, %v1015
    %v1017 = vmul.f32 %v1014, %v1016
    %v1018 = vadd.f32 %v1014, %v1017
    %vm1019 = vweird.f32 %v922
    %vm1020 = vweird.f32 %v1014
    %vm1021 = vmor %vm1019, %vm1020
    %v1022 = vsel %vm1021, %v1014, %v1018
    %v1023 = vand.u32 2147483647, %v922
    %vm1024 = vcmp.eq.f32.partialorder %v1023, 8.507059e+37
    %v1025 = vand.u32 %v922, 2147483648
    %v1026 = vor.u32 1.1754944e-38, %v1025
    %v1027 = vsel %vm1024, %v1026, %v1022
    %v1028 = vmul.f32 1.0, %v1027
    %v1029 = vrcp.pop %v923
    %v1030 = vmul.f32 %v923, %v1029
    %v1031 = vsub.f32 1.0, %v1030
    %v1032 = vmul.f32 %v1029, %v1031
    %v1033 = vadd.f32 %v1029, %v1032
    %vm1034 = vweird.f32 %v923
    %vm1035 = vweird.f32 %v1029
    %vm1036 = vmor %vm1034, %vm1035
    %v1037 = vsel %vm1036, %v1029, %v1033
    %v1038 = vand.u32 2147483647, %v923
    %vm1039 = vcmp.eq.f32.partialorder %v1038, 8.507059e+37
    %v1040 = vand.u32 %v923, 2147483648
    %v1041 = vor.u32 1.1754944e-38, %v1040
    %v1042 = vsel %vm1039, %v1041, %v1037
    %v1043 = vmul.f32 1.0, %v1042
    %v1044 = vmul.f32 %v938, 1.0614054
    %v1045 = vmul.f32 %v953, 1.0614054
    %v1046 = vmul.f32 %v968, 1.0614054
    %v1047 = vmul.f32 %v983, 1.0614054
    %v1048 = vmul.f32 %v998, 1.0614054
    %v1049 = vmul.f32 %v1013, 1.0614054
    %v1050 = vmul.f32 %v1028, 1.0614054
    %v1051 = vmul.f32 %v1043, 1.0614054
    %v1052 = vadd.f32 %v1044, -1.4531521
    %v1053 = vadd.f32 %v1045, -1.4531521
    %v1054 = vadd.f32 %v1046, -1.4531521
    %v1055 = vadd.f32 %v1047, -1.4531521
    %v1056 = vadd.f32 %v1048, -1.4531521
    %v1057 = vadd.f32 %v1049, -1.4531521
    %v1058 = vadd.f32 %v1050, -1.4531521
    %v1059 = vadd.f32 %v1051, -1.4531521
    %v1060 = vmul.f32 %v938, %v1052
    %v1061 = vmul.f32 %v953, %v1053
    %v1062 = vmul.f32 %v968, %v1054
    %v1063 = vmul.f32 %v983, %v1055
    %v1064 = vmul.f32 %v998, %v1056
    %v1065 = vmul.f32 %v1013, %v1057
    %v1066 = vmul.f32 %v1028, %v1058
    %v1067 = vmul.f32 %v1043, %v1059
    %v1068 = vadd.f32 %v1060, 1.4214138
    %v1069 = vadd.f32 %v1061, 1.4214138
    %v1070 = vadd.f32 %v1062, 1.4214138
    %v1071 = vadd.f32 %v1063, 1.4214138
    %v1072 = vadd.f32 %v1064, 1.4214138
    %v1073 = vadd.f32 %v1065, 1.4214138
    %v1074 = vadd.f32 %v1066, 1.4214138
    %v1075 = vadd.f32 %v1067, 1.4214138
    %v1076 = vmul.f32 %v938, %v1068
    %v1077 = vmul.f32 %v953, %v1069
    %v1078 = vmul.f32 %v968, %v1070
    %v1079 = vmul.f32 %v983, %v1071
    %v1080 = vmul.f32 %v998, %v1072
    %v1081 = vmul.f32 %v1013, %v1073
    %v1082 = vmul.f32 %v1028, %v1074
    %v1083 = vmul.f32 %v1043, %v1075
    %v1084 = vadd.f32 %v1076, -0.28449672
    %v1085 = vadd.f32 %v1077, -0.28449672
    %v1086 = vadd.f32 %v1078, -0.28449672
    %v1087 = vadd.f32 %v1079, -0.28449672
    %v1088 = vadd.f32 %v1080, -0.28449672
    %v1089 = vadd.f32 %v1081, -0.28449672
    %v1090 = vadd.f32 %v1082, -0.28449672
    %v1091 = vadd.f32 %v1083, -0.28449672
    %v1092 = vmul.f32 %v938, %v1084
    %v1093 = vmul.f32 %v953, %v1085
    %v1094 = vmul.f32 %v968, %v1086
    %v1095 = vmul.f32 %v983, %v1087
    %v1096 = vmul.f32 %v998, %v1088
    %v1097 = vmul.f32 %v1013, %v1089
    %v1098 = vmul.f32 %v1028, %v1090
    %v1099 = vmul.f32 %v1043, %v1091
    %v1100 = vadd.f32 %v1092, 0.2548296
    %v1101 = vadd.f32 %v1093, 0.2548296
    %v1102 = vadd.f32 %v1094, 0.2548296
    %v1103 = vadd.f32 %v1095, 0.2548296
    %v1104 = vadd.f32 %v1096, 0.2548296
    %v1105 = vadd.f32 %v1097, 0.2548296
    %v1106 = vadd.f32 %v1098, 0.2548296
    %v1107 = vadd.f32 %v1099, 0.2548296
    %v1108 = vmul.f32 %v938, %v1100
    %v1109 = vmul.f32 %v953, %v1101
    %v1110 = vmul.f32 %v968, %v1102
    %v1111 = vmul.f32 %v983, %v1103
    %v1112 = vmul.f32 %v998, %v1104
    %v1113 = vmul.f32 %v1013, %v1105
    %v1114 = vmul.f32 %v1028, %v1106
    %v1115 = vmul.f32 %v1043, %v1107
    %v1116 = vmul.f32 %v900, %v900
    %v1117 = vmul.f32 %v901, %v901
    %v1118 = vmul.f32 %v902, %v902
    %v1119 = vmul.f32 %v903, %v903
    %v1120 = vmul.f32 %v904, %v904
    %v1121 = vmul.f32 %v905, %v905
    %v1122 = vmul.f32 %v906, %v906
    %v1123 = vmul.f32 %v907, %v907
    %v1124 = vsub.f32 0.0, %v1116
    %v1125 = vsub.f32 0.0, %v1117
    %v1126 = vsub.f32 0.0, %v1118
    %v1127 = vsub.f32 0.0, %v1119
    %v1128 = vsub.f32 0.0, %v1120
    %v1129 = vsub.f32 0.0, %v1121
    %v1130 = vsub.f32 0.0, %v1122
    %v1131 = vsub.f32 0.0, %v1123
    %v1132 = vmul.f32 %v1124, 1.442695
    %v1133 = vpow.pop %v1132
    %v1134 = vmul.f32 %v1125, 1.442695
    %v1135 = vpow.pop %v1134
    %v1136 = vmul.f32 %v1126, 1.442695
    %v1137 = vpow.pop %v1136
    %v1138 = vmul.f32 %v1127, 1.442695
    %v1139 = vpow.pop %v1138
    %v1140 = vmul.f32 %v1128, 1.442695
    %v1141 = vpow.pop %v1140
    %v1142 = vmul.f32 %v1129, 1.442695
    %v1143 = vpow.pop %v1142
    %v1144 = vmul.f32 %v1130, 1.442695
    %v1145 = vpow.pop %v1144
    %v1146 = vmul.f32 %v1131, 1.442695
    %v1147 = vpow.pop %v1146
    %v1148 = vmul.f32 %v1108, %v1133
    %v1149 = vmul.f32 %v1109, %v1135
    %v1150 = vmul.f32 %v1110, %v1137
    %v1151 = vmul.f32 %v1111, %v1139
    %v1152 = vmul.f32 %v1112, %v1141
    %v1153 = vmul.f32 %v1113, %v1143
    %v1154 = vmul.f32 %v1114, %v1145
    %v1155 = vmul.f32 %v1115, %v1147
    %v1156 = vsub.f32 1.0, %v1148
    %v1157 = vsub.f32 1.0, %v1149
    %v1158 = vsub.f32 1.0, %v1150
    %v1159 = vsub.f32 1.0, %v1151
    %v1160 = vsub.f32 1.0, %v1152
    %v1161 = vsub.f32 1.0, %v1153
    %v1162 = vsub.f32 1.0, %v1154
    %v1163 = vsub.f32 1.0, %v1155
    %vm1164 = vcmp.lt.f32.partialorder %v892, 0.0
    %vm1165 = vcmp.lt.f32.partialorder %v893, 0.0
    %vm1166 = vcmp.lt.f32.partialorder %v894, 0.0
    %vm1167 = vcmp.lt.f32.partialorder %v895, 0.0
    %vm1168 = vcmp.lt.f32.partialorder %v896, 0.0
    %vm1169 = vcmp.lt.f32.partialorder %v897, 0.0
    %vm1170 = vcmp.lt.f32.partialorder %v898, 0.0
    %vm1171 = vcmp.lt.f32.partialorder %v899, 0.0
    %v1172 = vsub.f32 0.0, %v1156
    %v1173 = vsub.f32 0.0, %v1157
    %v1174 = vsub.f32 0.0, %v1158
    %v1175 = vsub.f32 0.0, %v1159
    %v1176 = vsub.f32 0.0, %v1160
    %v1177 = vsub.f32 0.0, %v1161
    %v1178 = vsub.f32 0.0, %v1162
    %v1179 = vsub.f32 0.0, %v1163
    %v1180 = vsel %vm1164, %v1172, %v1156
    %v1181 = vsel %vm1165, %v1173, %v1157
    %v1182 = vsel %vm1166, %v1174, %v1158
    %v1183 = vsel %vm1167, %v1175, %v1159
    %v1184 = vsel %vm1168, %v1176, %v1160
    %v1185 = vsel %vm1169, %v1177, %v1161
    %v1186 = vsel %vm1170, %v1178, %v1162
    %v1187 = vsel %vm1171, %v1179, %v1163
    %v1188 = vmul.f32 %v846, 0.5
    %v1189 = vmul.f32 %v860, 0.5
    %v1190 = vmul.f32 %v874, 0.5
    %v1191 = vmul.f32 %v888, 0.5
    %v1192 = vmul.f32 %v848, 0.5
    %v1193 = vmul.f32 %v862, 0.5
    %v1194 = vmul.f32 %v876, 0.5
    %v1195 = vmul.f32 %v890, 0.5
    %v1196 = vadd.f32 %v1180, 1.0
    %v1197 = vadd.f32 %v1181, 1.0
    %v1198 = vadd.f32 %v1182, 1.0
    %v1199 = vadd.f32 %v1183, 1.0
    %v1200 = vadd.f32 %v1184, 1.0
    %v1201 = vadd.f32 %v1185, 1.0
    %v1202 = vadd.f32 %v1186, 1.0
    %v1203 = vadd.f32 %v1187, 1.0
    %v1204 = vmul.f32 %v1188, %v1196
    %v1205 = vmul.f32 %v1189, %v1197
    %v1206 = vmul.f32 %v1190, %v1198
    %v1207 = vmul.f32 %v1191, %v1199
    %v1208 = vmul.f32 %v1192, %v1200
    %v1209 = vmul.f32 %v1193, %v1201
    %v1210 = vmul.f32 %v1194, %v1202
    %v1211 = vmul.f32 %v1195, %v1203
    %1213 = vset.pattern.permute.xlu0 0
    %1214 = vperm.xlu0 %1213, %v617
    %v1215 = vpop.permute.xlu0 %1214
    %1218 = vset.pattern.permute.xlu0 0
    %1219 = vperm.xlu0 %1218, %v632
    %v1220 = vpop.permute.xlu0 %1219
    %v1222 = vmul.f32 %v1204, %v1215
    %v1223 = vmul.f32 %v1208, %v1220
    %1224 = vset.pattern.permute.xlu0 1
    %1225 = vperm.xlu0 %1224, %v617
    %v1226 = vpop.permute.xlu0 %1225
    %1228 = vset.pattern.permute.xlu0 1
    %1229 = vperm.xlu0 %1228, %v632
    %v1230 = vpop.permute.xlu0 %1229
    %v1232 = vmul.f32 %v1205, %v1226
    %v1233 = vmul.f32 %v1209, %v1230
    %1234 = vset.pattern.permute.xlu0 2
    %1235 = vperm.xlu0 %1234, %v617
    %v1236 = vpop.permute.xlu0 %1235
    %1238 = vset.pattern.permute.xlu0 2
    %1239 = vperm.xlu0 %1238, %v632
    %v1240 = vpop.permute.xlu0 %1239
    %v1242 = vmul.f32 %v1206, %v1236
    %v1243 = vmul.f32 %v1210, %v1240
    %1244 = vset.pattern.permute.xlu0 3
    %1245 = vperm.xlu0 %1244, %v617
    %v1246 = vpop.permute.xlu0 %1245
    %1248 = vset.pattern.permute.xlu0 3
    %1249 = vperm.xlu0 %1248, %v632
    %v1250 = vpop.permute.xlu0 %1249
    %v1252 = vmul.f32 %v1207, %v1246
    %v1253 = vmul.f32 %v1211, %v1250
    %v1254 = vpack.c.bf16 %v1223, %v1222
    %v1255 = vpack.c.bf16 %v1233, %v1232
    %v1256 = vpack.c.bf16 %v1243, %v1242
    %v1257 = vpack.c.bf16 %v1253, %v1252
    %v1258 = vld [vmem:[#allocation4] sm:$0xf]
    %v1259 = vld [vmem:[#allocation4 + $0x4] sm:$0xf]
    %v1260 = vld [vmem:[#allocation4 + $0x8] sm:$0xf]
    %v1261 = vld [vmem:[#allocation4 + $0xc] sm:$0xf]
    %v1262 = vld [vmem:[#allocation4 + $0x10] sm:$0xf]
    %v1263 = vld [vmem:[#allocation4 + $0x14] sm:$0xf]
    %v1264 = vld [vmem:[#allocation4 + $0x18] sm:$0xf]
    %v1265 = vld [vmem:[#allocation4 + $0x1c] sm:$0xf]
    %v1266 = vld [vmem:[#allocation4 + $0x20] sm:$0xf]
    %v1267 = vld [vmem:[#allocation4 + $0x24] sm:$0xf]
    %v1268 = vld [vmem:[#allocation4 + $0x28] sm:$0xf]
    %v1269 = vld [vmem:[#allocation4 + $0x2c] sm:$0xf]
    %v1270 = vld [vmem:[#allocation4 + $0x30] sm:$0xf]
    %v1271 = vld [vmem:[#allocation4 + $0x34] sm:$0xf]
    %v1272 = vld [vmem:[#allocation4 + $0x38] sm:$0xf]
    %v1273 = vld [vmem:[#allocation4 + $0x3c] sm:$0xf]
    %v1274 = vld [vmem:[#allocation4 + $0x40] sm:$0xf]
    %v1275 = vld [vmem:[#allocation4 + $0x44] sm:$0xf]
    %v1276 = vld [vmem:[#allocation4 + $0x48] sm:$0xf]
    %v1277 = vld [vmem:[#allocation4 + $0x4c] sm:$0xf]
    %v1278 = vld [vmem:[#allocation4 + $0x50] sm:$0xf]
    %v1279 = vld [vmem:[#allocation4 + $0x54] sm:$0xf]
    %v1280 = vld [vmem:[#allocation4 + $0x58] sm:$0xf]
    %v1281 = vld [vmem:[#allocation4 + $0x5c] sm:$0xf]
    %v1282 = vld [vmem:[#allocation4 + $0x60] sm:$0xf]
    %v1283 = vld [vmem:[#allocation4 + $0x64] sm:$0xf]
    %v1284 = vld [vmem:[#allocation4 + $0x68] sm:$0xf]
    %v1285 = vld [vmem:[#allocation4 + $0x6c] sm:$0xf]
    %v1286 = vld [vmem:[#allocation4 + $0x70] sm:$0xf]
    %v1287 = vld [vmem:[#allocation4 + $0x74] sm:$0xf]
    %v1288 = vld [vmem:[#allocation4 + $0x78] sm:$0xf]
    %v1289 = vld [vmem:[#allocation4 + $0x7c] sm:$0xf]
    %v1290 = vld [vmem:[#allocation4 + $0x80] sm:$0xf]
    %v1291 = vld [vmem:[#allocation4 + $0x84] sm:$0xf]
    %v1292 = vld [vmem:[#allocation4 + $0x88] sm:$0xf]
    %v1293 = vld [vmem:[#allocation4 + $0x8c] sm:$0xf]
    %v1294 = vld [vmem:[#allocation4 + $0x90] sm:$0xf]
    %v1295 = vld [vmem:[#allocation4 + $0x94] sm:$0xf]
    %v1296 = vld [vmem:[#allocation4 + $0x98] sm:$0xf]
    %v1297 = vld [vmem:[#allocation4 + $0x9c] sm:$0xf]
    %v1298 = vld [vmem:[#allocation4 + $0xa0] sm:$0xf]
    %v1299 = vld [vmem:[#allocation4 + $0xa4] sm:$0xf]
    %v1300 = vld [vmem:[#allocation4 + $0xa8] sm:$0xf]
    %v1301 = vld [vmem:[#allocation4 + $0xac] sm:$0xf]
    %v1302 = vld [vmem:[#allocation4 + $0xb0] sm:$0xf]
    %v1303 = vld [vmem:[#allocation4 + $0xb4] sm:$0xf]
    %v1304 = vld [vmem:[#allocation4 + $0xb8] sm:$0xf]
    %v1305 = vld [vmem:[#allocation4 + $0xbc] sm:$0xf]
    %v1306 = vld [vmem:[#allocation4 + $0xc0] sm:$0xf]
    %v1307 = vld [vmem:[#allocation4 + $0xc4] sm:$0xf]
    %v1308 = vld [vmem:[#allocation4 + $0xc8] sm:$0xf]
    %v1309 = vld [vmem:[#allocation4 + $0xcc] sm:$0xf]
    %v1310 = vld [vmem:[#allocation4 + $0xd0] sm:$0xf]
    %v1311 = vld [vmem:[#allocation4 + $0xd4] sm:$0xf]
    %v1312 = vld [vmem:[#allocation4 + $0xd8] sm:$0xf]
    %v1313 = vld [vmem:[#allocation4 + $0xdc] sm:$0xf]
    %v1314 = vld [vmem:[#allocation4 + $0xe0] sm:$0xf]
    %v1315 = vld [vmem:[#allocation4 + $0xe4] sm:$0xf]
    %v1316 = vld [vmem:[#allocation4 + $0xe8] sm:$0xf]
    %v1317 = vld [vmem:[#allocation4 + $0xec] sm:$0xf]
    %v1318 = vld [vmem:[#allocation4 + $0xf0] sm:$0xf]
    %v1319 = vld [vmem:[#allocation4 + $0xf4] sm:$0xf]
    %v1320 = vld [vmem:[#allocation4 + $0xf8] sm:$0xf]
    %v1321 = vld [vmem:[#allocation4 + $0xfc] sm:$0xf]
    %v1322 = vld [vmem:[%s7] sm:$0xf]
    %v1323 = vperm.slane %v1322, 0
    %v1324 = vmul.f32 %v1215, %v1323
    %v1325 = vmul.f32 %v1220, %v1323
    %v1390 = vunpack.c.l.b16 %v1258
    %v1391 = vunpack.c.l.b16 %v1259
    %v1392 = vunpack.c.l.b16 %v1260
    %v1393 = vunpack.c.l.b16 %v1261
    %v1394 = vunpack.c.l.b16 %v1262
    %v1395 = vunpack.c.l.b16 %v1263
    %v1396 = vunpack.c.l.b16 %v1264
    %v1397 = vunpack.c.l.b16 %v1265
    %v1398 = vunpack.c.l.b16 %v1266
    %v1399 = vunpack.c.l.b16 %v1267
    %v1400 = vunpack.c.l.b16 %v1268
    %v1401 = vunpack.c.l.b16 %v1269
    %v1402 = vunpack.c.l.b16 %v1270
    %v1403 = vunpack.c.l.b16 %v1271
    %v1404 = vunpack.c.l.b16 %v1272
    %v1405 = vunpack.c.l.b16 %v1273
    %v1406 = vunpack.c.l.b16 %v1274
    %v1407 = vunpack.c.l.b16 %v1275
    %v1408 = vunpack.c.l.b16 %v1276
    %v1409 = vunpack.c.l.b16 %v1277
    %v1410 = vunpack.c.l.b16 %v1278
    %v1411 = vunpack.c.l.b16 %v1279
    %v1412 = vunpack.c.l.b16 %v1280
    %v1413 = vunpack.c.l.b16 %v1281
    %v1414 = vunpack.c.l.b16 %v1282
    %v1415 = vunpack.c.l.b16 %v1283
    %v1416 = vunpack.c.l.b16 %v1284
    %v1417 = vunpack.c.l.b16 %v1285
    %v1418 = vunpack.c.l.b16 %v1286
    %v1419 = vunpack.c.l.b16 %v1287
    %v1420 = vunpack.c.l.b16 %v1288
    %v1421 = vunpack.c.l.b16 %v1289
    %v1422 = vunpack.c.l.b16 %v1290
    %v1423 = vunpack.c.l.b16 %v1291
    %v1424 = vunpack.c.l.b16 %v1292
    %v1425 = vunpack.c.l.b16 %v1293
    %v1426 = vunpack.c.l.b16 %v1294
    %v1427 = vunpack.c.l.b16 %v1295
    %v1428 = vunpack.c.l.b16 %v1296
    %v1429 = vunpack.c.l.b16 %v1297
    %v1430 = vunpack.c.l.b16 %v1298
    %v1431 = vunpack.c.l.b16 %v1299
    %v1432 = vunpack.c.l.b16 %v1300
    %v1433 = vunpack.c.l.b16 %v1301
    %v1434 = vunpack.c.l.b16 %v1302
    %v1435 = vunpack.c.l.b16 %v1303
    %v1436 = vunpack.c.l.b16 %v1304
    %v1437 = vunpack.c.l.b16 %v1305
    %v1438 = vunpack.c.l.b16 %v1306
    %v1439 = vunpack.c.l.b16 %v1307
    %v1440 = vunpack.c.l.b16 %v1308
    %v1441 = vunpack.c.l.b16 %v1309
    %v1442 = vunpack.c.l.b16 %v1310
    %v1443 = vunpack.c.l.b16 %v1311
    %v1444 = vunpack.c.l.b16 %v1312
    %v1445 = vunpack.c.l.b16 %v1313
    %v1446 = vunpack.c.l.b16 %v1314
    %v1447 = vunpack.c.l.b16 %v1315
    %v1448 = vunpack.c.l.b16 %v1316
    %v1449 = vunpack.c.l.b16 %v1317
    %v1450 = vunpack.c.l.b16 %v1318
    %v1451 = vunpack.c.l.b16 %v1319
    %v1452 = vunpack.c.l.b16 %v1320
    %v1453 = vunpack.c.l.b16 %v1321
    %v1454 = vpack.c.b16 %v1391, %v1390
    %v1455 = vpack.c.b16 %v1393, %v1392
    %v1456 = vpack.c.b16 %v1395, %v1394
    %v1457 = vpack.c.b16 %v1397, %v1396
    %v1458 = vpack.c.b16 %v1399, %v1398
    %v1459 = vpack.c.b16 %v1401, %v1400
    %v1460 = vpack.c.b16 %v1403, %v1402
    %v1461 = vpack.c.b16 %v1405, %v1404
    %v1462 = vpack.c.b16 %v1407, %v1406
    %v1463 = vpack.c.b16 %v1409, %v1408
    %v1464 = vpack.c.b16 %v1411, %v1410
    %v1465 = vpack.c.b16 %v1413, %v1412
    %v1466 = vpack.c.b16 %v1415, %v1414
    %v1467 = vpack.c.b16 %v1417, %v1416
    %v1468 = vpack.c.b16 %v1419, %v1418
    %v1469 = vpack.c.b16 %v1421, %v1420
    %v1470 = vpack.c.b16 %v1423, %v1422
    %v1471 = vpack.c.b16 %v1425, %v1424
    %v1472 = vpack.c.b16 %v1427, %v1426
    %v1473 = vpack.c.b16 %v1429, %v1428
    %v1474 = vpack.c.b16 %v1431, %v1430
    %v1475 = vpack.c.b16 %v1433, %v1432
    %v1476 = vpack.c.b16 %v1435, %v1434
    %v1477 = vpack.c.b16 %v1437, %v1436
    %v1478 = vpack.c.b16 %v1439, %v1438
    %v1479 = vpack.c.b16 %v1441, %v1440
    %v1480 = vpack.c.b16 %v1443, %v1442
    %v1481 = vpack.c.b16 %v1445, %v1444
    %v1482 = vpack.c.b16 %v1447, %v1446
    %v1483 = vpack.c.b16 %v1449, %v1448
    %v1484 = vpack.c.b16 %v1451, %v1450
    %v1485 = vpack.c.b16 %v1453, %v1452
    %1518 = vmatpush.bf16.msra.mxu0 %v1461
    %1519 = vmatpush.bf16.msra.mxu0 %v1460
    %1520 = vmatpush.bf16.msra.mxu0 %v1459
    %1521 = vmatpush.bf16.msra.mxu0 %v1458
    %1522 = vmatpush.bf16.msra.mxu0 %v1457
    %1523 = vmatpush.bf16.msra.mxu0 %v1456
    %1524 = vmatpush.bf16.msra.mxu0 %v1455
    %1525 = vmatpush.bf16.msra.mxu0 %v1454
    %1526 = vmatmul.bf16.gmra.mxu0 %v1254
    %v1527 = vpop.f32.mrf.mxu0
    %v1528 = vadd.f32 %v1324, %v1527
    %v1529 = vpop.f32.mrf.mxu0
    %v1530 = vadd.f32 %v1325, %v1529
    %1531 = vdwg.mxu0
    %1532 = vmatpush.bf16.msra.mxu0 %v1469
    %1533 = vmatpush.bf16.msra.mxu0 %v1468
    %1534 = vmatpush.bf16.msra.mxu0 %v1467
    %1535 = vmatpush.bf16.msra.mxu0 %v1466
    %1536 = vmatpush.bf16.msra.mxu0 %v1465
    %1537 = vmatpush.bf16.msra.mxu0 %v1464
    %1538 = vmatpush.bf16.msra.mxu0 %v1463
    %1539 = vmatpush.bf16.msra.mxu0 %v1462
    %1540 = vmatmul.bf16.gmra.mxu0 %v1255
    %v1541 = vpop.f32.mrf.mxu0
    %v1542 = vadd.f32 %v1528, %v1541
    %v1543 = vpop.f32.mrf.mxu0
    %v1544 = vadd.f32 %v1530, %v1543
    %1545 = vdwg.mxu0
    %1546 = vmatpush.bf16.msra.mxu0 %v1477
    %1547 = vmatpush.bf16.msra.mxu0 %v1476
    %1548 = vmatpush.bf16.msra.mxu0 %v1475
    %1549 = vmatpush.bf16.msra.mxu0 %v1474
    %1550 = vmatpush.bf16.msra.mxu0 %v1473
    %1551 = vmatpush.bf16.msra.mxu0 %v1472
    %1552 = vmatpush.bf16.msra.mxu0 %v1471
    %1553 = vmatpush.bf16.msra.mxu0 %v1470
    %1554 = vmatmul.bf16.gmra.mxu0 %v1256
    %v1555 = vpop.f32.mrf.mxu0
    %v1556 = vadd.f32 %v1542, %v1555
    %v1557 = vpop.f32.mrf.mxu0
    %v1558 = vadd.f32 %v1544, %v1557
    %1559 = vdwg.mxu0
    %1560 = vmatpush.bf16.msra.mxu0 %v1485
    %1561 = vmatpush.bf16.msra.mxu0 %v1484
    %1562 = vmatpush.bf16.msra.mxu0 %v1483
    %1563 = vmatpush.bf16.msra.mxu0 %v1482
    %1564 = vmatpush.bf16.msra.mxu0 %v1481
    %1565 = vmatpush.bf16.msra.mxu0 %v1480
    %1566 = vmatpush.bf16.msra.mxu0 %v1479
    %1567 = vmatpush.bf16.msra.mxu0 %v1478
    %1568 = vmatmul.bf16.gmra.mxu0 %v1257
    %v1569 = vpop.f32.mrf.mxu0
    %v1570 = vadd.f32 %v1556, %v1569
    %v1571 = vpop.f32.mrf.mxu0
    %v1572 = vadd.f32 %v1558, %v1571
    %1573 = vdwg.mxu0
    %v1574 = vperm.slane %v1322, 1
    %v1575 = vmul.f32 %v1226, %v1574
    %v1576 = vmul.f32 %v1230, %v1574
    %v1577 = vadd.f32 %v1570, %v1575
    %v1578 = vadd.f32 %v1572, %v1576
    %v1579 = vperm.slane %v1322, 2
    %v1580 = vmul.f32 %v1236, %v1579
    %v1581 = vmul.f32 %v1240, %v1579
    %v1582 = vadd.f32 %v1577, %v1580
    %v1583 = vadd.f32 %v1578, %v1581
    %v1584 = vperm.slane %v1322, 3
    %v1585 = vmul.f32 %v1246, %v1584
    %v1586 = vmul.f32 %v1250, %v1584
    %v1587 = vadd.f32 %v1582, %v1585
    %v1588 = vadd.f32 %v1583, %v1586
    %1589 = vst [vmem:[%s8] sm:$0xff] %v1587
    %1590 = vst [vmem:[%s8 + $0x8] sm:$0xff] %v1588
    // Predicated region
    $region42: #{sparse_moe_forward.1} parent=1 // pred_check
      _
    $region43: #{sparse_moe_forward.1} parent=1 // pred_check_branch
      %1592 = sbr.rel (0) target = $region45
    $region44: #{sparse_moe_forward.1} parent=1 // pred_region
      _
    $region45: #{sparse_moe_forward.1} parent=1 // pred_fallthru
      _
    // Predicated region
    $region46: #{sparse_moe_forward.1} parent=1 // pred_check
      _
    $region47: #{sparse_moe_forward.1} parent=1 // pred_check_branch
      %1594 = sbr.rel (0) target = $region49
    $region48: #{sparse_moe_forward.1} parent=1 // pred_region
      _
    $region49: #{sparse_moe_forward.1} parent=1 // pred_fallthru
      _
    %1595 = vsyncpa [#allocation3], 1
    %1596 = vsyncpa [#allocation5], 1

</llo_original>
